<compile_context>
chip_gen: v7x
topology: tpu7x:2x2x1
jax: 0.10.0
libtpu: 0.0.40
codegen_flags: <defaults>
</compile_context>

<pallas_src>
import jax
import jax.numpy as jnp
import numpy as np
from jax.experimental import pallas as pl
from jax.experimental.pallas import tpu as pltpu

INPUT_DIM = 21
D_PAD = 32            # input features padded to a bf16-friendly sublane multiple
H1, H2, H3, OUT = 128, 64, 32, 1
BN_EPS = 1e-5
NEG_SLOPE = 0.1       # nn.LeakyReLU(0.1)


def floodnet_kernel(xt_ref, w1t_ref, w2t_ref, w3t_ref, w4t_ref, b_ref, o_ref):
    """Fused forward for one batch tile, batch-on-lanes layout.

    xt_ref : (D_PAD, TB) bf16  -- x^T; row INPUT_DIM is all-ones (layer-1 bias lane)
    w1t_ref: (H1, D_PAD) bf16  -- Linear1^T, column INPUT_DIM holds b1
    w2t_ref: (H2, H1)    bf16  -- (BN1-folded Linear2)^T
    w3t_ref: (H3, H2)    bf16  -- (BN2-folded Linear3)^T
    w4t_ref: (OUT, H3)   bf16  -- Linear4^T
    b_ref  : (H2, 3)     f32   -- col0 = b2 (64), col1 = b3 (32, padded), col2 = b4 (1)
    o_ref  : (OUT, TB)   f32   -- lane-dense output row
    """

    def leaky(h):  # f32 on the VPU (safe on v5e's f32-only VPU)
        return jnp.where(h > 0, h, NEG_SLOPE * h)

    xt = xt_ref[...]                                                      # (32, TB)

    # Linear(21,128) + LeakyReLU  (bias folded into the ones-row of x^T)
    h1 = jnp.dot(w1t_ref[...], xt, preferred_element_type=jnp.float32)    # (128, TB)
    h1 = leaky(h1).astype(jnp.bfloat16)

    # BN1-folded Linear(128,64) + LeakyReLU   (Dropout = identity in eval mode)
    h2 = jnp.dot(w2t_ref[...], h1, preferred_element_type=jnp.float32)    # (64, TB)
    h2 = leaky(h2 + b_ref[:, 0:1]).astype(jnp.bfloat16)

    # BN2-folded Linear(64,32) + LeakyReLU
    h3 = jnp.dot(w3t_ref[...], h2, preferred_element_type=jnp.float32)    # (32, TB)
    h3 = leaky(h3 + b_ref[:H3, 1:2]).astype(jnp.bfloat16)

    # Linear(32,1): (1,32) @ (32,TB) -> lane-dense (1, TB) store (no transpose needed)
    o = jnp.dot(w4t_ref[...], h3, preferred_element_type=jnp.float32)     # (1, TB)
    o_ref[...] = o + b_ref[0:1, 2:3]


def prepare_params(raw):
    """Fold eval-mode BN into the following Linears, transpose everything for the
    batch-on-lanes layout, pad layer-1's K dim 21 -> 32 and fold b1 into the pad column,
    cast weights to bf16, and pack the remaining biases into one small f32 array."""
    (w1, b1, (g1, be1, m1, v1), w2, b2, (g2, be2, m2, v2), w3, b3, w4, b4) = raw

    s1 = g1 / jnp.sqrt(v1 + BN_EPS)      # (1, 128)
    t1 = be1 - m1 * s1
    s2 = g2 / jnp.sqrt(v2 + BN_EPS)      # (1, 64)
    t2 = be2 - m2 * s2

    # leaky(h)*s + t then @ w + b  ==  leaky(h) @ (s^T * w) + (t @ w + b)
    w2f = w2 * s1.reshape(-1, 1)         # (128, 64)
    b2f = b2 + t1 @ w2                   # (1, 64)
    w3f = w3 * s2.reshape(-1, 1)         # (64, 32)
    b3f = b3 + t2 @ w3                   # (1, 32)

    # Layer-1 weight, transposed and K-padded; column INPUT_DIM carries b1 (paired with
    # the all-ones row the wrapper writes into x^T).
    w1t = jnp.zeros((H1, D_PAD), jnp.float32)
    w1t = w1t.at[:, :INPUT_DIM].set(w1.T)
    w1t = w1t.at[:, INPUT_DIM].set(b1.reshape(-1))

    w2t = w2f.T                          # (64, 128)
    w3t = w3f.T                          # (32, 64)
    w4t = w4.T                           # (1, 32)

    bpack = jnp.zeros((H2, 3), jnp.float32)
    bpack = bpack.at[:, 0].set(b2f.reshape(-1))
    bpack = bpack.at[:H3, 1].set(b3f.reshape(-1))
    bpack = bpack.at[0, 2].set(b4.reshape(-1)[0])

    bf16 = jnp.bfloat16
    return (w1t.astype(bf16), w2t.astype(bf16), w3t.astype(bf16), w4t.astype(bf16), bpack)


def _transpose_pad_input(x, n_pad):
    """(N, 21) f32 -> (D_PAD, n_pad) bf16 with row INPUT_DIM = 1 (bias lane), rest zero."""
    N = x.shape[0]
    xt = jnp.zeros((D_PAD, n_pad), jnp.float32)
    xt = xt.at[:INPUT_DIM, :N].set(x.T)
    xt = xt.at[INPUT_DIM, :].set(1.0)
    return xt.astype(jnp.bfloat16)


def floodnet_forward(x, prepared, *, tile_b_max=2048):
    """x: (N, 21) float32. Returns (N, 1) float32 (eval-mode forward)."""
    N, D = x.shape
    assert D == INPUT_DIM

    # Tile the batch along the lane axis: tiles are multiples of 128 lanes, capped at
    # tile_b_max; the tile count is forced even (when > 1) so v7x's two TCs balance.
    num_tiles = pl.cdiv(N, tile_b_max)
    if num_tiles > 1 and num_tiles % 2 == 1:
        num_tiles += 1
    tile_b = pl.cdiv(pl.cdiv(N, num_tiles), 128) * 128
    n_pad = num_tiles * tile_b

    xt = _transpose_pad_input(x, n_pad)
    w1t, w2t, w3t, w4t, bpack = prepared

    def full(arr):   # whole-array block, constant index across grid steps (fetched once)
        return pl.BlockSpec(arr.shape, lambda i: (0, 0))

    out_row = pl.pallas_call(
        floodnet_kernel,
        out_shape=jax.ShapeDtypeStruct((OUT, n_pad), jnp.float32),
        grid_spec=pl.GridSpec(
            grid=(num_tiles,),
            in_specs=[
                pl.BlockSpec((D_PAD, tile_b), lambda i: (0, i)),      # x^T batch tile
                full(w1t), full(w2t), full(w3t), full(w4t), full(bpack),
            ],
            out_specs=pl.BlockSpec((OUT, tile_b), lambda i: (0, i)),  # lane-dense row
        ),
        compiler_params=pltpu.CompilerParams(
            dimension_semantics=("parallel",)),   # megacore-shards batch tiles on v7x
    )(xt, w1t, w2t, w3t, w4t, bpack)

    return out_row[0, :N].reshape(N, 1)


def init_params(key):
    """PyTorch-default-like init; BN running stats made non-trivial so folding is tested."""
    ks = jax.random.split(key, 16)

    def linear(kw, kb, fan_in, fan_out):
        bound = 1.0 / np.sqrt(fan_in)
        w = jax.random.uniform(kw, (fan_in, fan_out), jnp.float32, -bound, bound)
        b = jax.random.uniform(kb, (1, fan_out), jnp.float32, -bound, bound)
        return w, b

    def bn(kg, kb, km, kv, n):
        gamma = jax.random.uniform(kg, (1, n), jnp.float32, 0.5, 1.5)
        beta = 0.1 * jax.random.normal(kb, (1, n), jnp.float32)
        mean = 0.5 * jax.random.normal(km, (1, n), jnp.float32)
        var = jax.random.uniform(kv, (1, n), jnp.float32, 0.5, 1.5)
        return gamma, beta, mean, var

    w1, b1 = linear(ks[0], ks[1], INPUT_DIM, H1)
    w2, b2 = linear(ks[2], ks[3], H1, H2)
    w3, b3 = linear(ks[4], ks[5], H2, H3)
    w4, b4 = linear(ks[6], ks[7], H3, OUT)
    bn1 = bn(ks[8], ks[9], ks[10], ks[11], H1)
    bn2 = bn(ks[12], ks[13], ks[14], ks[15], H2)

    return (w1, b1, bn1, w2, b2, bn2, w3, b3, w4, b4)


def reference_f32(x, raw):
    """Pure-f32 eval-mode reference matching the PyTorch module exactly."""
    (w1, b1, (g1, be1, m1, v1), w2, b2, (g2, be2, m2, v2), w3, b3, w4, b4) = raw
    leaky = lambda h: jnp.where(h > 0, h, NEG_SLOPE * h)
    h = leaky(x @ w1 + b1)
    h = (h - m1) / jnp.sqrt(v1 + BN_EPS) * g1 + be1
    h = leaky(h @ w2 + b2)
    h = (h - m2) / jnp.sqrt(v2 + BN_EPS) * g2 + be2
    h = leaky(h @ w3 + b3)
    return h @ w4 + b4


def reference_matched(x, prepared):
    """Same folded / transposed bf16 params and op order as the kernel (tight tolerance)."""
    w1t, w2t, w3t, w4t, bpack = prepared
    leaky = lambda h: jnp.where(h > 0, h, NEG_SLOPE * h)
    xt = _transpose_pad_input(x, x.shape[0])
    h1 = leaky(jnp.dot(w1t, xt, preferred_element_type=jnp.float32)).astype(jnp.bfloat16)
    h2 = leaky(jnp.dot(w2t, h1, preferred_element_type=jnp.float32)
               + bpack[:, 0:1]).astype(jnp.bfloat16)
    h3 = leaky(jnp.dot(w3t, h2, preferred_element_type=jnp.float32)
               + bpack[:H3, 1:2]).astype(jnp.bfloat16)
    o = jnp.dot(w4t, h3, preferred_element_type=jnp.float32) + bpack[0:1, 2:3]
    return o.T


if __name__ == "__main__":
    key = jax.random.PRNGKey(0)
    k_x, k_p = jax.random.split(key)

    N = 600  # not a multiple of 128: exercises lane padding of the batch axis
    x = jax.random.normal(k_x, (N, INPUT_DIM), jnp.float32)

    raw = init_params(k_p)
    prepared = prepare_params(raw)

    fwd = jax.jit(floodnet_forward)
    out = jax.block_until_ready(fwd(x, prepared))
    assert out.shape == (N, OUT)

    # 1) mechanical check vs. an identically-cast/folded XLA reference (tight tolerance)
    ref_m = reference_matched(x, prepared)
    np.testing.assert_allclose(np.asarray(out), np.asarray(ref_m), rtol=5e-3, atol=5e-3)

    # 2) semantic check vs. the pure-f32 PyTorch-equivalent forward (bf16 tolerance)
    ref_f = reference_f32(x, raw)
    np.testing.assert_allclose(np.asarray(out), np.asarray(ref_f), rtol=1e-1, atol=1e-1)

    print("KERNEL_OK")
</pallas_src>

<mosaic_0001>
module attributes {stable_mosaic.version = 11 : i64} {
  func.func @floodnet_kernel(%arg0: i32, %arg1: memref<32x640xbf16, #tpu.memory_space<vmem>>, %arg2: memref<128x32xbf16, #tpu.memory_space<vmem>>, %arg3: memref<64x128xbf16, #tpu.memory_space<vmem>>, %arg4: memref<32x64xbf16, #tpu.memory_space<vmem>>, %arg5: memref<1x32xbf16, #tpu.memory_space<vmem>>, %arg6: memref<64x3xf32, #tpu.memory_space<vmem>>, %arg7: memref<1x640xf32, #tpu.memory_space<vmem>>) attributes {dimension_semantics = [#tpu.dimension_semantics<parallel>], iteration_bounds = array<i64: 1>, scalar_prefetch = 0 : i64, scratch_operands = 0 : i64, tpu.core_type = #tpu.core_type<tc>, window_params = [{transform_indices = @transform_0, window_bounds = array<i64: 32, 640>}, {pipeline_mode = #tpu.pipeline_mode<synchronous>, transform_indices = @transform_1, window_bounds = array<i64: 128, 32>}, {pipeline_mode = #tpu.pipeline_mode<synchronous>, transform_indices = @transform_2, window_bounds = array<i64: 64, 128>}, {pipeline_mode = #tpu.pipeline_mode<synchronous>, transform_indices = @transform_3, window_bounds = array<i64: 32, 64>}, {pipeline_mode = #tpu.pipeline_mode<synchronous>, transform_indices = @transform_4, window_bounds = array<i64: 1, 32>}, {pipeline_mode = #tpu.pipeline_mode<synchronous>, transform_indices = @transform_5, window_bounds = array<i64: 64, 3>}, {transform_indices = @transform_6, window_bounds = array<i64: 1, 640>}]} {
    %c0 = arith.constant 0 : index
    %c0_0 = arith.constant 0 : index
    %0 = vector.load %arg1[%c0, %c0_0] : memref<32x640xbf16, #tpu.memory_space<vmem>>, vector<32x640xbf16>
    %c0_1 = arith.constant 0 : index
    %c0_2 = arith.constant 0 : index
    %1 = vector.load %arg2[%c0_1, %c0_2] : memref<128x32xbf16, #tpu.memory_space<vmem>>, vector<128x32xbf16>
    %cst = arith.constant dense<0.000000e+00> : vector<128x640xf32>
    %2 = tpu.matmul %1, %0, %cst {dimension_numbers = #tpu.dot_dimension_numbers<[1], [0], [0], [1], [0, 0, 1, 1], [], []>} : vector<128x32xbf16>, vector<32x640xbf16>, vector<128x640xf32> -> vector<128x640xf32>
    %cst_3 = arith.constant 0.000000e+00 : f32
    %3 = vector.broadcast %cst_3 : f32 to vector<128x640xf32>
    %4 = arith.cmpf ogt, %2, %3 : vector<128x640xf32>
    %cst_4 = arith.constant 1.000000e-01 : f32
    %5 = vector.broadcast %cst_4 : f32 to vector<128x640xf32>
    %6 = arith.mulf %5, %2 : vector<128x640xf32>
    %7 = arith.select %4, %2, %6 : vector<128x640xi1>, vector<128x640xf32>
    %8 = arith.truncf %7 : vector<128x640xf32> to vector<128x640xbf16>
    %c0_5 = arith.constant 0 : index
    %c0_6 = arith.constant 0 : index
    %9 = vector.load %arg3[%c0_5, %c0_6] : memref<64x128xbf16, #tpu.memory_space<vmem>>, vector<64x128xbf16>
    %cst_7 = arith.constant dense<0.000000e+00> : vector<64x640xf32>
    %10 = tpu.matmul %9, %8, %cst_7 {dimension_numbers = #tpu.dot_dimension_numbers<[1], [0], [0], [1], [0, 0, 1, 1], [], []>} : vector<64x128xbf16>, vector<128x640xbf16>, vector<64x640xf32> -> vector<64x640xf32>
    %c0_8 = arith.constant 0 : index
    %c0_9 = arith.constant 0 : index
    %11 = vector.load %arg6[%c0_8, %c0_9] : memref<64x3xf32, #tpu.memory_space<vmem>>, vector<64x1xf32>
    %12 = vector.broadcast %11 : vector<64x1xf32> to vector<64x640xf32>
    %13 = arith.addf %10, %12 : vector<64x640xf32>
    %cst_10 = arith.constant 0.000000e+00 : f32
    %14 = vector.broadcast %cst_10 : f32 to vector<64x640xf32>
    %15 = arith.cmpf ogt, %13, %14 : vector<64x640xf32>
    %cst_11 = arith.constant 1.000000e-01 : f32
    %16 = vector.broadcast %cst_11 : f32 to vector<64x640xf32>
    %17 = arith.mulf %16, %13 : vector<64x640xf32>
    %18 = arith.select %15, %13, %17 : vector<64x640xi1>, vector<64x640xf32>
    %19 = arith.truncf %18 : vector<64x640xf32> to vector<64x640xbf16>
    %c0_12 = arith.constant 0 : index
    %c0_13 = arith.constant 0 : index
    %20 = vector.load %arg4[%c0_12, %c0_13] : memref<32x64xbf16, #tpu.memory_space<vmem>>, vector<32x64xbf16>
    %cst_14 = arith.constant dense<0.000000e+00> : vector<32x640xf32>
    %21 = tpu.matmul %20, %19, %cst_14 {dimension_numbers = #tpu.dot_dimension_numbers<[1], [0], [0], [1], [0, 0, 1, 1], [], []>} : vector<32x64xbf16>, vector<64x640xbf16>, vector<32x640xf32> -> vector<32x640xf32>
    %c0_15 = arith.constant 0 : index
    %c1 = arith.constant 1 : index
    %22 = vector.load %arg6[%c0_15, %c1] : memref<64x3xf32, #tpu.memory_space<vmem>>, vector<32x1xf32>
    %23 = vector.broadcast %22 : vector<32x1xf32> to vector<32x640xf32>
    %24 = arith.addf %21, %23 : vector<32x640xf32>
    %cst_16 = arith.constant 0.000000e+00 : f32
    %25 = vector.broadcast %cst_16 : f32 to vector<32x640xf32>
    %26 = arith.cmpf ogt, %24, %25 : vector<32x640xf32>
    %cst_17 = arith.constant 1.000000e-01 : f32
    %27 = vector.broadcast %cst_17 : f32 to vector<32x640xf32>
    %28 = arith.mulf %27, %24 : vector<32x640xf32>
    %29 = arith.select %26, %24, %28 : vector<32x640xi1>, vector<32x640xf32>
    %30 = arith.truncf %29 : vector<32x640xf32> to vector<32x640xbf16>
    %c0_18 = arith.constant 0 : index
    %c0_19 = arith.constant 0 : index
    %31 = vector.load %arg5[%c0_18, %c0_19] : memref<1x32xbf16, #tpu.memory_space<vmem>>, vector<1x32xbf16>
    %cst_20 = arith.constant dense<0.000000e+00> : vector<1x640xf32>
    %32 = tpu.matmul %31, %30, %cst_20 {dimension_numbers = #tpu.dot_dimension_numbers<[1], [0], [0], [1], [0, 0, 1, 1], [], []>} : vector<1x32xbf16>, vector<32x640xbf16>, vector<1x640xf32> -> vector<1x640xf32>
    %c0_21 = arith.constant 0 : index
    %c2 = arith.constant 2 : index
    %33 = vector.load %arg6[%c0_21, %c2] : memref<64x3xf32, #tpu.memory_space<vmem>>, vector<1x1xf32>
    %34 = vector.broadcast %33 : vector<1x1xf32> to vector<1x640xf32>
    %35 = arith.addf %32, %34 : vector<1x640xf32>
    %c0_22 = arith.constant 0 : index
    %c0_23 = arith.constant 0 : index
    %36 = vector.load %arg7[%c0_22, %c0_23] : memref<1x640xf32, #tpu.memory_space<vmem>>, vector<1x640xf32>
    tpu.vector_store %arg7[%c0_22, %c0_23], %35 {strides = array<i32>} : memref<1x640xf32, #tpu.memory_space<vmem>>, vector<1x640xf32>,
    return
  }
  func.func @transform_0(%arg0: i32) -> (i32, i32) {
    %c0_i32 = arith.constant 0 : i32
    %c0_i32_0 = arith.constant 0 : i32
    return %c0_i32, %arg0 : i32, i32
  }
  func.func @transform_1(%arg0: i32) -> (i32, i32) {
    %c0_i32 = arith.constant 0 : i32
    %c0_i32_0 = arith.constant 0 : i32
    %c0_i32_1 = arith.constant 0 : i32
    return %c0_i32, %c0_i32_0 : i32, i32
  }
  func.func @transform_2(%arg0: i32) -> (i32, i32) {
    %c0_i32 = arith.constant 0 : i32
    %c0_i32_0 = arith.constant 0 : i32
    %c0_i32_1 = arith.constant 0 : i32
    return %c0_i32, %c0_i32_0 : i32, i32
  }
  func.func @transform_3(%arg0: i32) -> (i32, i32) {
    %c0_i32 = arith.constant 0 : i32
    %c0_i32_0 = arith.constant 0 : i32
    %c0_i32_1 = arith.constant 0 : i32
    return %c0_i32, %c0_i32_0 : i32, i32
  }
  func.func @transform_4(%arg0: i32) -> (i32, i32) {
    %c0_i32 = arith.constant 0 : i32
    %c0_i32_0 = arith.constant 0 : i32
    %c0_i32_1 = arith.constant 0 : i32
    return %c0_i32, %c0_i32_0 : i32, i32
  }
  func.func @transform_5(%arg0: i32) -> (i32, i32) {
    %c0_i32 = arith.constant 0 : i32
    %c0_i32_0 = arith.constant 0 : i32
    %c0_i32_1 = arith.constant 0 : i32
    return %c0_i32, %c0_i32_0 : i32, i32
  }
  func.func @transform_6(%arg0: i32) -> (i32, i32) {
    %c0_i32 = arith.constant 0 : i32
    %c0_i32_0 = arith.constant 0 : i32
    return %c0_i32, %arg0 : i32, i32
  }
}

</mosaic_0001>

<llo_original>
// kernel: floodnet_forward.1
$region0: #{floodnet_forward.1}
  #allocation0 [shape = 'u32[]', space=smem, size = 0x4, offset = 0x4, fixed_abs, tag = 'smem constant byte address 0x4 - core index']
  #allocation1 [shape = 'u32[144,128]{1,0:T(1,128)}', space=vmem, size = 0x12000, scoped, tag = 'internal scratch']
  %s0 = inlined_call_operand.vmem [shape: bf16[32,640], index: 0, kind: input, shape index: {}]
  %s1 = inlined_call_operand.vmem [shape: bf16[128,32], index: 1, kind: input, shape index: {}]
  %s2 = inlined_call_operand.vmem [shape: bf16[64,128], index: 2, kind: input, shape index: {}]
  %s3 = inlined_call_operand.vmem [shape: bf16[32,64], index: 3, kind: input, shape index: {}]
  %s4 = inlined_call_operand.vmem [shape: bf16[1,32], index: 4, kind: input, shape index: {}]
  %s5 = inlined_call_operand.vmem [shape: f32[64,3], index: 5, kind: input, shape index: {}]
  %s6 = inlined_call_operand.vmem [shape: f32[1,640], index: 6, kind: output, shape index: {}]
  %s7 = sld [smem:[#allocation0]]
  $region34: #{floodnet_forward.1} parent=0
    _
  %s9 = ssub.s32 1, %s7
  %s10 = scalar_select 0, %s9, %s7
  // Predicated region
  $region2: #{floodnet_forward.1} parent=0 // pred_check
    _
  $region3: #{floodnet_forward.1} parent=0 // pred_check_branch
    %12 = sbr.rel (0) target = $region5
  $region4: #{floodnet_forward.1} parent=0 // pred_region
    _
  $region5: #{floodnet_forward.1} parent=0 // pred_fallthru
    _
  // Predicated region
  $region6: #{floodnet_forward.1} parent=0 // pred_check
    _
  $region7: #{floodnet_forward.1} parent=0 // pred_check_branch
    %14 = sbr.rel (0) target = $region9
  $region8: #{floodnet_forward.1} parent=0 // pred_region
    _
  $region9: #{floodnet_forward.1} parent=0 // pred_fallthru
    _
  // Predicated region
  $region10: #{floodnet_forward.1} parent=0 // pred_check
    _
  $region11: #{floodnet_forward.1} parent=0 // pred_check_branch
    %16 = sbr.rel (0) target = $region13
  $region12: #{floodnet_forward.1} parent=0 // pred_region
    _
  $region13: #{floodnet_forward.1} parent=0 // pred_fallthru
    _
  // Predicated region
  $region14: #{floodnet_forward.1} parent=0 // pred_check
    _
  $region15: #{floodnet_forward.1} parent=0 // pred_check_branch
    %18 = sbr.rel (0) target = $region17
  $region16: #{floodnet_forward.1} parent=0 // pred_region
    _
  $region17: #{floodnet_forward.1} parent=0 // pred_fallthru
    _
  // Predicated region
  $region18: #{floodnet_forward.1} parent=0 // pred_check
    _
  $region19: #{floodnet_forward.1} parent=0 // pred_check_branch
    %20 = sbr.rel (0) target = $region21
  $region20: #{floodnet_forward.1} parent=0 // pred_region
    _
  $region21: #{floodnet_forward.1} parent=0 // pred_fallthru
    _
  // Predicated region
  $region22: #{floodnet_forward.1} parent=0 // pred_check
    _
  $region23: #{floodnet_forward.1} parent=0 // pred_check_branch
    %22 = sbr.rel (0) target = $region25
  $region24: #{floodnet_forward.1} parent=0 // pred_region
    _
  $region25: #{floodnet_forward.1} parent=0 // pred_fallthru
    _
  %v24 = vld [vmem:[%s0] sm:$0xff]
  %v25 = vld [vmem:[%s0 + $0x8] sm:$0xff]
  %v26 = vld [vmem:[%s0 + $0x10] sm:$0xf]
  %v27 = vld [vmem:[%s0 + $0x14] sm:$0xff]
  %v28 = vld [vmem:[%s0 + $0x1c] sm:$0xff]
  %v29 = vld [vmem:[%s0 + $0x24] sm:$0xf]
  %v30 = vld [vmem:[%s0 + $0x28] sm:$0xff]
  %v31 = vld [vmem:[%s0 + $0x30] sm:$0xff]
  %v32 = vld [vmem:[%s0 + $0x38] sm:$0xf]
  %v33 = vld [vmem:[%s0 + $0x3c] sm:$0xff]
  %v34 = vld [vmem:[%s0 + $0x44] sm:$0xff]
  %v35 = vld [vmem:[%s0 + $0x4c] sm:$0xf]
  %v36 = vld [vmem:[%s1] sm:$0xf]
  %v37 = vld [vmem:[%s1 + $0x4] sm:$0xf]
  %v38 = vld [vmem:[%s1 + $0x8] sm:$0xf]
  %v39 = vld [vmem:[%s1 + $0xc] sm:$0xf]
  %v40 = vld [vmem:[%s1 + $0x10] sm:$0xf]
  %v41 = vld [vmem:[%s1 + $0x14] sm:$0xf]
  %v42 = vld [vmem:[%s1 + $0x18] sm:$0xf]
  %v43 = vld [vmem:[%s1 + $0x1c] sm:$0xf]
  %v44 = vld [vmem:[%s1 + $0x20] sm:$0xf]
  %v45 = vld [vmem:[%s1 + $0x24] sm:$0xf]
  %v46 = vld [vmem:[%s1 + $0x28] sm:$0xf]
  %v47 = vld [vmem:[%s1 + $0x2c] sm:$0xf]
  %v48 = vld [vmem:[%s1 + $0x30] sm:$0xf]
  %v49 = vld [vmem:[%s1 + $0x34] sm:$0xf]
  %v50 = vld [vmem:[%s1 + $0x38] sm:$0xf]
  %v51 = vld [vmem:[%s1 + $0x3c] sm:$0xf]
  %v68 = vunpack.c.l.b16 %v36
  %v69 = vunpack.c.l.b16 %v37
  %v70 = vunpack.c.l.b16 %v38
  %v71 = vunpack.c.l.b16 %v39
  %v72 = vunpack.c.l.b16 %v40
  %v73 = vunpack.c.l.b16 %v41
  %v74 = vunpack.c.l.b16 %v42
  %v75 = vunpack.c.l.b16 %v43
  %v76 = vunpack.c.l.b16 %v44
  %v77 = vunpack.c.l.b16 %v45
  %v78 = vunpack.c.l.b16 %v46
  %v79 = vunpack.c.l.b16 %v47
  %v80 = vunpack.c.l.b16 %v48
  %v81 = vunpack.c.l.b16 %v49
  %v82 = vunpack.c.l.b16 %v50
  %v83 = vunpack.c.l.b16 %v51
  %v84 = vpack.c.b16 %v69, %v68
  %v85 = vpack.c.b16 %v71, %v70
  %v86 = vpack.c.b16 %v73, %v72
  %v87 = vpack.c.b16 %v75, %v74
  %v88 = vpack.c.b16 %v77, %v76
  %v89 = vpack.c.b16 %v79, %v78
  %v90 = vpack.c.b16 %v81, %v80
  %v91 = vpack.c.b16 %v83, %v82
  %v104 = vunpack.c.l.b16 %v24
  %v105 = vunpack.c.h.b16 %v24
  %v106 = vunpack.c.l.b16 %v25
  %v107 = vunpack.c.h.b16 %v25
  %v108 = vunpack.c.l.b16 %v26
  %v109 = vunpack.c.l.b16 %v27
  %v110 = vunpack.c.h.b16 %v27
  %v111 = vunpack.c.l.b16 %v28
  %v112 = vunpack.c.h.b16 %v28
  %v113 = vunpack.c.l.b16 %v29
  %v114 = vunpack.c.l.b16 %v30
  %v115 = vunpack.c.h.b16 %v30
  %v116 = vunpack.c.l.b16 %v31
  %v117 = vunpack.c.h.b16 %v31
  %v118 = vunpack.c.l.b16 %v32
  %v119 = vunpack.c.l.b16 %v33
  %v120 = vunpack.c.h.b16 %v33
  %v121 = vunpack.c.l.b16 %v34
  %v122 = vunpack.c.h.b16 %v34
  %v123 = vunpack.c.l.b16 %v35
  %v124 = vpack.c.b16 %v109, %v104
  %v125 = vpack.c.b16 %v110, %v105
  %v126 = vpack.c.b16 %v111, %v106
  %v127 = vpack.c.b16 %v112, %v107
  %v128 = vpack.c.b16 %v113, %v108
  %v129 = vpack.c.b16 %v119, %v114
  %v130 = vpack.c.b16 %v120, %v115
  %v131 = vpack.c.b16 %v121, %v116
  %v132 = vpack.c.b16 %v122, %v117
  %v133 = vpack.c.b16 %v123, %v118
  %vm144 = vcmask 261120
  %v146 = vsel %vm144, %v84, 0
  %v149 = vsel %vm144, %v85, 0
  %v152 = vsel %vm144, %v86, 0
  %v155 = vsel %vm144, %v87, 0
  %v158 = vsel %vm144, %v88, 0
  %v161 = vsel %vm144, %v89, 0
  %v164 = vsel %vm144, %v90, 0
  %v167 = vsel %vm144, %v91, 0
  %169 = vmatprep.subr.bf16.mxu0 %v125
  %170 = vmatpush1.bf16.msra.mxu0 %v124
  %171 = vmatprep.subr.bf16.mxu0 %v130
  %172 = vmatpush1.bf16.msra.mxu0 %v129
  %173 = vmatprep.subr.bf16.mxu0 0
  %174 = vmatpush1.bf16.msra.mxu0 0
  %175 = vmatprep.subr.bf16.mxu0 0
  %176 = vmatpush1.bf16.msra.mxu0 0
  %177 = vmatprep.subr.bf16.mxu0 0
  %178 = vmatpush1.bf16.msra.mxu0 0
  %179 = vmatprep.subr.bf16.mxu0 0
  %180 = vmatpush1.bf16.msra.mxu0 0
  %181 = vmatprep.subr.bf16.mxu0 0
  %182 = vmatpush1.bf16.msra.mxu0 0
  %183 = vmatprep.subr.bf16.mxu0 0
  %184 = vmatpush1.bf16.msra.mxu0 0
  %185 = vmatprep.subr.bf16.mxu0 0
  %186 = vmatpush1.bf16.msra.mxu0 0
  %187 = vmatprep.subr.bf16.mxu0 0
  %188 = vmatpush1.bf16.msra.mxu0 0
  %189 = vmatprep.subr.bf16.mxu0 0
  %190 = vmatpush1.bf16.msra.mxu0 0
  %191 = vmatprep.subr.bf16.mxu0 0
  %192 = vmatpush1.bf16.msra.mxu0 0
  %193 = vmatprep.subr.bf16.mxu0 0
  %194 = vmatpush1.bf16.msra.mxu0 0
  %195 = vmatprep.subr.bf16.mxu0 0
  %196 = vmatpush1.bf16.msra.mxu0 0
  %197 = vmatprep.subr.bf16.mxu0 0
  %198 = vmatpush1.bf16.msra.mxu0 0
  %199 = vmatprep.subr.bf16.mxu0 0
  %200 = vmatpush1.bf16.msra.mxu0 0
  %201 = vmatprep.mubr.bf16.mxu0 0
  %202 = vmatmul.mubr.bf16.gmra.mrb[0].mxu0 %v146
  %v203 = vpop.f32.mrb[0].mxu0
  %v204 = vadd.f32 0.0, %v203
  %v205 = vpop.f32.mrb[0].mxu0
  %v206 = vadd.f32 0.0, %v205
  %v207 = vpop.f32.mrb[0].mxu0
  %v208 = vadd.f32 0.0, %v207
  %v209 = vpop.f32.mrb[0].mxu0
  %v210 = vadd.f32 0.0, %v209
  %211 = vmatprep.mubr.bf16.mxu0 0
  %212 = vmatmul.mubr.bf16.gmra.mrb[0].mxu0 %v149
  %v213 = vpop.f32.mrb[0].mxu0
  %v214 = vadd.f32 0.0, %v213
  %v215 = vpop.f32.mrb[0].mxu0
  %v216 = vadd.f32 0.0, %v215
  %v217 = vpop.f32.mrb[0].mxu0
  %v218 = vadd.f32 0.0, %v217
  %v219 = vpop.f32.mrb[0].mxu0
  %v220 = vadd.f32 0.0, %v219
  %221 = vmatprep.mubr.bf16.mxu0 0
  %222 = vmatmul.mubr.bf16.gmra.mrb[0].mxu0 %v152
  %v223 = vpop.f32.mrb[0].mxu0
  %v224 = vadd.f32 0.0, %v223
  %v225 = vpop.f32.mrb[0].mxu0
  %v226 = vadd.f32 0.0, %v225
  %v227 = vpop.f32.mrb[0].mxu0
  %v228 = vadd.f32 0.0, %v227
  %v229 = vpop.f32.mrb[0].mxu0
  %v230 = vadd.f32 0.0, %v229
  %231 = vmatprep.mubr.bf16.mxu0 0
  %232 = vmatmul.mubr.bf16.gmra.mrb[0].mxu0 %v155
  %v233 = vpop.f32.mrb[0].mxu0
  %v234 = vadd.f32 0.0, %v233
  %v235 = vpop.f32.mrb[0].mxu0
  %v236 = vadd.f32 0.0, %v235
  %v237 = vpop.f32.mrb[0].mxu0
  %v238 = vadd.f32 0.0, %v237
  %v239 = vpop.f32.mrb[0].mxu0
  %v240 = vadd.f32 0.0, %v239
  %241 = vmatprep.mubr.bf16.mxu0 0
  %242 = vmatmul.mubr.bf16.gmra.mrb[0].mxu0 %v158
  %v243 = vpop.f32.mrb[0].mxu0
  %v244 = vadd.f32 0.0, %v243
  %v245 = vpop.f32.mrb[0].mxu0
  %v246 = vadd.f32 0.0, %v245
  %v247 = vpop.f32.mrb[0].mxu0
  %v248 = vadd.f32 0.0, %v247
  %v249 = vpop.f32.mrb[0].mxu0
  %v250 = vadd.f32 0.0, %v249
  %251 = vmatprep.mubr.bf16.mxu0 0
  %252 = vmatmul.mubr.bf16.gmra.mrb[0].mxu0 %v161
  %v253 = vpop.f32.mrb[0].mxu0
  %v254 = vadd.f32 0.0, %v253
  %v255 = vpop.f32.mrb[0].mxu0
  %v256 = vadd.f32 0.0, %v255
  %v257 = vpop.f32.mrb[0].mxu0
  %v258 = vadd.f32 0.0, %v257
  %v259 = vpop.f32.mrb[0].mxu0
  %v260 = vadd.f32 0.0, %v259
  %261 = vmatprep.mubr.bf16.mxu0 0
  %262 = vmatmul.mubr.bf16.gmra.mrb[0].mxu0 %v164
  %v263 = vpop.f32.mrb[0].mxu0
  %v264 = vadd.f32 0.0, %v263
  %v265 = vpop.f32.mrb[0].mxu0
  %v266 = vadd.f32 0.0, %v265
  %v267 = vpop.f32.mrb[0].mxu0
  %v268 = vadd.f32 0.0, %v267
  %v269 = vpop.f32.mrb[0].mxu0
  %v270 = vadd.f32 0.0, %v269
  %271 = vmatprep.mubr.bf16.mxu0 0
  %272 = vmatmul.mubr.bf16.gmra.mrb[0].mxu0 %v167
  %v273 = vpop.f32.mrb[0].mxu0
  %v274 = vadd.f32 0.0, %v273
  %v275 = vpop.f32.mrb[0].mxu0
  %v276 = vadd.f32 0.0, %v275
  %v277 = vpop.f32.mrb[0].mxu0
  %v278 = vadd.f32 0.0, %v277
  %v279 = vpop.f32.mrb[0].mxu0
  %v280 = vadd.f32 0.0, %v279
  %281 = vdwg.mxu0
  %282 = vmatprep.subr.bf16.mxu0 %v127
  %283 = vmatpush1.bf16.msra.mxu0 %v126
  %284 = vmatprep.subr.bf16.mxu0 %v132
  %285 = vmatpush1.bf16.msra.mxu0 %v131
  %286 = vmatprep.subr.bf16.mxu0 0
  %287 = vmatpush1.bf16.msra.mxu0 0
  %288 = vmatprep.subr.bf16.mxu0 0
  %289 = vmatpush1.bf16.msra.mxu0 0
  %290 = vmatprep.subr.bf16.mxu0 0
  %291 = vmatpush1.bf16.msra.mxu0 0
  %292 = vmatprep.subr.bf16.mxu0 0
  %293 = vmatpush1.bf16.msra.mxu0 0
  %294 = vmatprep.subr.bf16.mxu0 0
  %295 = vmatpush1.bf16.msra.mxu0 0
  %296 = vmatprep.subr.bf16.mxu0 0
  %297 = vmatpush1.bf16.msra.mxu0 0
  %298 = vmatprep.subr.bf16.mxu0 0
  %299 = vmatpush1.bf16.msra.mxu0 0
  %300 = vmatprep.subr.bf16.mxu0 0
  %301 = vmatpush1.bf16.msra.mxu0 0
  %302 = vmatprep.subr.bf16.mxu0 0
  %303 = vmatpush1.bf16.msra.mxu0 0
  %304 = vmatprep.subr.bf16.mxu0 0
  %305 = vmatpush1.bf16.msra.mxu0 0
  %306 = vmatprep.subr.bf16.mxu0 0
  %307 = vmatpush1.bf16.msra.mxu0 0
  %308 = vmatprep.subr.bf16.mxu0 0
  %309 = vmatpush1.bf16.msra.mxu0 0
  %310 = vmatprep.subr.bf16.mxu0 0
  %311 = vmatpush1.bf16.msra.mxu0 0
  %312 = vmatprep.subr.bf16.mxu0 0
  %313 = vmatpush1.bf16.msra.mxu0 0
  %314 = vmatprep.mubr.bf16.mxu0 0
  %315 = vmatmul.mubr.bf16.gmra.mrb[0].mxu0 %v146
  %v316 = vpop.f32.mrb[0].mxu0
  %v317 = vadd.f32 0.0, %v316
  %v318 = vpop.f32.mrb[0].mxu0
  %v319 = vadd.f32 0.0, %v318
  %v320 = vpop.f32.mrb[0].mxu0
  %v321 = vadd.f32 0.0, %v320
  %v322 = vpop.f32.mrb[0].mxu0
  %v323 = vadd.f32 0.0, %v322
  %324 = vmatprep.mubr.bf16.mxu0 0
  %325 = vmatmul.mubr.bf16.gmra.mrb[0].mxu0 %v149
  %v326 = vpop.f32.mrb[0].mxu0
  %v327 = vadd.f32 0.0, %v326
  %v328 = vpop.f32.mrb[0].mxu0
  %v329 = vadd.f32 0.0, %v328
  %v330 = vpop.f32.mrb[0].mxu0
  %v331 = vadd.f32 0.0, %v330
  %v332 = vpop.f32.mrb[0].mxu0
  %v333 = vadd.f32 0.0, %v332
  %334 = vmatprep.mubr.bf16.mxu0 0
  %335 = vmatmul.mubr.bf16.gmra.mrb[0].mxu0 %v152
  %v336 = vpop.f32.mrb[0].mxu0
  %v337 = vadd.f32 0.0, %v336
  %v338 = vpop.f32.mrb[0].mxu0
  %v339 = vadd.f32 0.0, %v338
  %v340 = vpop.f32.mrb[0].mxu0
  %v341 = vadd.f32 0.0, %v340
  %v342 = vpop.f32.mrb[0].mxu0
  %v343 = vadd.f32 0.0, %v342
  %344 = vmatprep.mubr.bf16.mxu0 0
  %345 = vmatmul.mubr.bf16.gmra.mrb[0].mxu0 %v155
  %v346 = vpop.f32.mrb[0].mxu0
  %v347 = vadd.f32 0.0, %v346
  %v348 = vpop.f32.mrb[0].mxu0
  %v349 = vadd.f32 0.0, %v348
  %v350 = vpop.f32.mrb[0].mxu0
  %v351 = vadd.f32 0.0, %v350
  %v352 = vpop.f32.mrb[0].mxu0
  %v353 = vadd.f32 0.0, %v352
  %354 = vmatprep.mubr.bf16.mxu0 0
  %355 = vmatmul.mubr.bf16.gmra.mrb[0].mxu0 %v158
  %v356 = vpop.f32.mrb[0].mxu0
  %v357 = vadd.f32 0.0, %v356
  %v358 = vpop.f32.mrb[0].mxu0
  %v359 = vadd.f32 0.0, %v358
  %v360 = vpop.f32.mrb[0].mxu0
  %v361 = vadd.f32 0.0, %v360
  %v362 = vpop.f32.mrb[0].mxu0
  %v363 = vadd.f32 0.0, %v362
  %364 = vmatprep.mubr.bf16.mxu0 0
  %365 = vmatmul.mubr.bf16.gmra.mrb[0].mxu0 %v161
  %v366 = vpop.f32.mrb[0].mxu0
  %v367 = vadd.f32 0.0, %v366
  %v368 = vpop.f32.mrb[0].mxu0
  %v369 = vadd.f32 0.0, %v368
  %v370 = vpop.f32.mrb[0].mxu0
  %v371 = vadd.f32 0.0, %v370
  %v372 = vpop.f32.mrb[0].mxu0
  %v373 = vadd.f32 0.0, %v372
  %374 = vmatprep.mubr.bf16.mxu0 0
  %375 = vmatmul.mubr.bf16.gmra.mrb[0].mxu0 %v164
  %v376 = vpop.f32.mrb[0].mxu0
  %v377 = vadd.f32 0.0, %v376
  %v378 = vpop.f32.mrb[0].mxu0
  %v379 = vadd.f32 0.0, %v378
  %v380 = vpop.f32.mrb[0].mxu0
  %v381 = vadd.f32 0.0, %v380
  %v382 = vpop.f32.mrb[0].mxu0
  %v383 = vadd.f32 0.0, %v382
  %384 = vmatprep.mubr.bf16.mxu0 0
  %385 = vmatmul.mubr.bf16.gmra.mrb[0].mxu0 %v167
  %v386 = vpop.f32.mrb[0].mxu0
  %v387 = vadd.f32 0.0, %v386
  %v388 = vpop.f32.mrb[0].mxu0
  %v389 = vadd.f32 0.0, %v388
  %v390 = vpop.f32.mrb[0].mxu0
  %v391 = vadd.f32 0.0, %v390
  %v392 = vpop.f32.mrb[0].mxu0
  %v393 = vadd.f32 0.0, %v392
  %394 = vdwg.mxu0
  %395 = vmatprep.subr.bf16.mxu0 0
  %396 = vmatpush1.bf16.msra.mxu0 %v128
  %397 = vmatprep.subr.bf16.mxu0 0
  %398 = vmatpush1.bf16.msra.mxu0 %v133
  %399 = vmatprep.subr.bf16.mxu0 0
  %400 = vmatpush1.bf16.msra.mxu0 0
  %401 = vmatprep.subr.bf16.mxu0 0
  %402 = vmatpush1.bf16.msra.mxu0 0
  %403 = vmatprep.subr.bf16.mxu0 0
  %404 = vmatpush1.bf16.msra.mxu0 0
  %405 = vmatprep.subr.bf16.mxu0 0
  %406 = vmatpush1.bf16.msra.mxu0 0
  %407 = vmatprep.subr.bf16.mxu0 0
  %408 = vmatpush1.bf16.msra.mxu0 0
  %409 = vmatprep.subr.bf16.mxu0 0
  %410 = vmatpush1.bf16.msra.mxu0 0
  %411 = vmatprep.subr.bf16.mxu0 0
  %412 = vmatpush1.bf16.msra.mxu0 0
  %413 = vmatprep.subr.bf16.mxu0 0
  %414 = vmatpush1.bf16.msra.mxu0 0
  %415 = vmatprep.subr.bf16.mxu0 0
  %416 = vmatpush1.bf16.msra.mxu0 0
  %417 = vmatprep.subr.bf16.mxu0 0
  %418 = vmatpush1.bf16.msra.mxu0 0
  %419 = vmatprep.subr.bf16.mxu0 0
  %420 = vmatpush1.bf16.msra.mxu0 0
  %421 = vmatprep.subr.bf16.mxu0 0
  %422 = vmatpush1.bf16.msra.mxu0 0
  %423 = vmatprep.subr.bf16.mxu0 0
  %424 = vmatpush1.bf16.msra.mxu0 0
  %425 = vmatprep.subr.bf16.mxu0 0
  %426 = vmatpush1.bf16.msra.mxu0 0
  %427 = vmatprep.mubr.bf16.mxu0 0
  %428 = vmatmul.mubr.bf16.gmra.mrb[0].mxu0 %v146
  %v429 = vpop.f32.mrb[0].mxu0
  %v430 = vadd.f32 0.0, %v429
  %v431 = vpop.f32.mrb[0].mxu0
  %v432 = vpop.f32.mrb[0].mxu0
  %v433 = vadd.f32 0.0, %v432
  %v434 = vpop.f32.mrb[0].mxu0
  %435 = vmatprep.mubr.bf16.mxu0 0
  %436 = vmatmul.mubr.bf16.gmra.mrb[0].mxu0 %v149
  %v437 = vpop.f32.mrb[0].mxu0
  %v438 = vadd.f32 0.0, %v437
  %v439 = vpop.f32.mrb[0].mxu0
  %v440 = vpop.f32.mrb[0].mxu0
  %v441 = vadd.f32 0.0, %v440
  %v442 = vpop.f32.mrb[0].mxu0
  %443 = vmatprep.mubr.bf16.mxu0 0
  %444 = vmatmul.mubr.bf16.gmra.mrb[0].mxu0 %v152
  %v445 = vpop.f32.mrb[0].mxu0
  %v446 = vadd.f32 0.0, %v445
  %v447 = vpop.f32.mrb[0].mxu0
  %v448 = vpop.f32.mrb[0].mxu0
  %v449 = vadd.f32 0.0, %v448
  %v450 = vpop.f32.mrb[0].mxu0
  %451 = vmatprep.mubr.bf16.mxu0 0
  %452 = vmatmul.mubr.bf16.gmra.mrb[0].mxu0 %v155
  %v453 = vpop.f32.mrb[0].mxu0
  %v454 = vadd.f32 0.0, %v453
  %v455 = vpop.f32.mrb[0].mxu0
  %v456 = vpop.f32.mrb[0].mxu0
  %v457 = vadd.f32 0.0, %v456
  %v458 = vpop.f32.mrb[0].mxu0
  %459 = vmatprep.mubr.bf16.mxu0 0
  %460 = vmatmul.mubr.bf16.gmra.mrb[0].mxu0 %v158
  %v461 = vpop.f32.mrb[0].mxu0
  %v462 = vadd.f32 0.0, %v461
  %v463 = vpop.f32.mrb[0].mxu0
  %v464 = vpop.f32.mrb[0].mxu0
  %v465 = vadd.f32 0.0, %v464
  %v466 = vpop.f32.mrb[0].mxu0
  %467 = vmatprep.mubr.bf16.mxu0 0
  %468 = vmatmul.mubr.bf16.gmra.mrb[0].mxu0 %v161
  %v469 = vpop.f32.mrb[0].mxu0
  %v470 = vadd.f32 0.0, %v469
  %v471 = vpop.f32.mrb[0].mxu0
  %v472 = vpop.f32.mrb[0].mxu0
  %v473 = vadd.f32 0.0, %v472
  %v474 = vpop.f32.mrb[0].mxu0
  %475 = vmatprep.mubr.bf16.mxu0 0
  %476 = vmatmul.mubr.bf16.gmra.mrb[0].mxu0 %v164
  %v477 = vpop.f32.mrb[0].mxu0
  %v478 = vadd.f32 0.0, %v477
  %v479 = vpop.f32.mrb[0].mxu0
  %v480 = vpop.f32.mrb[0].mxu0
  %v481 = vadd.f32 0.0, %v480
  %v482 = vpop.f32.mrb[0].mxu0
  %483 = vmatprep.mubr.bf16.mxu0 0
  %484 = vmatmul.mubr.bf16.gmra.mrb[0].mxu0 %v167
  %v485 = vpop.f32.mrb[0].mxu0
  %v486 = vadd.f32 0.0, %v485
  %v487 = vpop.f32.mrb[0].mxu0
  %v488 = vpop.f32.mrb[0].mxu0
  %v489 = vadd.f32 0.0, %v488
  %v490 = vpop.f32.mrb[0].mxu0
  %491 = vdwg.mxu0
  %vm492 = vcmp.gt.f32.partialorder %v204, 0.0
  %vm493 = vcmp.gt.f32.partialorder %v206, 0.0
  %vm494 = vcmp.gt.f32.partialorder %v317, 0.0
  %vm495 = vcmp.gt.f32.partialorder %v319, 0.0
  %vm496 = vcmp.gt.f32.partialorder %v430, 0.0
  %vm497 = vcmp.gt.f32.partialorder %v208, 0.0
  %vm498 = vcmp.gt.f32.partialorder %v210, 0.0
  %vm499 = vcmp.gt.f32.partialorder %v321, 0.0
  %vm500 = vcmp.gt.f32.partialorder %v323, 0.0
  %vm501 = vcmp.gt.f32.partialorder %v433, 0.0
  %vm502 = vcmp.gt.f32.partialorder %v214, 0.0
  %vm503 = vcmp.gt.f32.partialorder %v216, 0.0
  %vm504 = vcmp.gt.f32.partialorder %v327, 0.0
  %vm505 = vcmp.gt.f32.partialorder %v329, 0.0
  %vm506 = vcmp.gt.f32.partialorder %v438, 0.0
  %vm507 = vcmp.gt.f32.partialorder %v218, 0.0
  %vm508 = vcmp.gt.f32.partialorder %v220, 0.0
  %vm509 = vcmp.gt.f32.partialorder %v331, 0.0
  %vm510 = vcmp.gt.f32.partialorder %v333, 0.0
  %vm511 = vcmp.gt.f32.partialorder %v441, 0.0
  %vm512 = vcmp.gt.f32.partialorder %v224, 0.0
  %vm513 = vcmp.gt.f32.partialorder %v226, 0.0
  %vm514 = vcmp.gt.f32.partialorder %v337, 0.0
  %vm515 = vcmp.gt.f32.partialorder %v339, 0.0
  %vm516 = vcmp.gt.f32.partialorder %v446, 0.0
  %vm517 = vcmp.gt.f32.partialorder %v228, 0.0
  %vm518 = vcmp.gt.f32.partialorder %v230, 0.0
  %vm519 = vcmp.gt.f32.partialorder %v341, 0.0
  %vm520 = vcmp.gt.f32.partialorder %v343, 0.0
  %vm521 = vcmp.gt.f32.partialorder %v449, 0.0
  %vm522 = vcmp.gt.f32.partialorder %v234, 0.0
  %vm523 = vcmp.gt.f32.partialorder %v236, 0.0
  %vm524 = vcmp.gt.f32.partialorder %v347, 0.0
  %vm525 = vcmp.gt.f32.partialorder %v349, 0.0
  %vm526 = vcmp.gt.f32.partialorder %v454, 0.0
  %vm527 = vcmp.gt.f32.partialorder %v238, 0.0
  %vm528 = vcmp.gt.f32.partialorder %v240, 0.0
  %vm529 = vcmp.gt.f32.partialorder %v351, 0.0
  %vm530 = vcmp.gt.f32.partialorder %v353, 0.0
  %vm531 = vcmp.gt.f32.partialorder %v457, 0.0
  %vm532 = vcmp.gt.f32.partialorder %v244, 0.0
  %vm533 = vcmp.gt.f32.partialorder %v246, 0.0
  %vm534 = vcmp.gt.f32.partialorder %v357, 0.0
  %vm535 = vcmp.gt.f32.partialorder %v359, 0.0
  %vm536 = vcmp.gt.f32.partialorder %v462, 0.0
  %vm537 = vcmp.gt.f32.partialorder %v248, 0.0
  %vm538 = vcmp.gt.f32.partialorder %v250, 0.0
  %vm539 = vcmp.gt.f32.partialorder %v361, 0.0
  %vm540 = vcmp.gt.f32.partialorder %v363, 0.0
  %vm541 = vcmp.gt.f32.partialorder %v465, 0.0
  %vm542 = vcmp.gt.f32.partialorder %v254, 0.0
  %vm543 = vcmp.gt.f32.partialorder %v256, 0.0
  %vm544 = vcmp.gt.f32.partialorder %v367, 0.0
  %vm545 = vcmp.gt.f32.partialorder %v369, 0.0
  %vm546 = vcmp.gt.f32.partialorder %v470, 0.0
  %vm547 = vcmp.gt.f32.partialorder %v258, 0.0
  %vm548 = vcmp.gt.f32.partialorder %v260, 0.0
  %vm549 = vcmp.gt.f32.partialorder %v371, 0.0
  %vm550 = vcmp.gt.f32.partialorder %v373, 0.0
  %vm551 = vcmp.gt.f32.partialorder %v473, 0.0
  %vm552 = vcmp.gt.f32.partialorder %v264, 0.0
  %vm553 = vcmp.gt.f32.partialorder %v266, 0.0
  %vm554 = vcmp.gt.f32.partialorder %v377, 0.0
  %vm555 = vcmp.gt.f32.partialorder %v379, 0.0
  %vm556 = vcmp.gt.f32.partialorder %v478, 0.0
  %vm557 = vcmp.gt.f32.partialorder %v268, 0.0
  %vm558 = vcmp.gt.f32.partialorder %v270, 0.0
  %vm559 = vcmp.gt.f32.partialorder %v381, 0.0
  %vm560 = vcmp.gt.f32.partialorder %v383, 0.0
  %vm561 = vcmp.gt.f32.partialorder %v481, 0.0
  %vm562 = vcmp.gt.f32.partialorder %v274, 0.0
  %vm563 = vcmp.gt.f32.partialorder %v276, 0.0
  %vm564 = vcmp.gt.f32.partialorder %v387, 0.0
  %vm565 = vcmp.gt.f32.partialorder %v389, 0.0
  %vm566 = vcmp.gt.f32.partialorder %v486, 0.0
  %vm567 = vcmp.gt.f32.partialorder %v278, 0.0
  %vm568 = vcmp.gt.f32.partialorder %v280, 0.0
  %vm569 = vcmp.gt.f32.partialorder %v391, 0.0
  %vm570 = vcmp.gt.f32.partialorder %v393, 0.0
  %vm571 = vcmp.gt.f32.partialorder %v489, 0.0
  %v572 = vmul.f32 %v204, 0.1
  %v573 = vmul.f32 %v206, 0.1
  %v574 = vmul.f32 %v317, 0.1
  %v575 = vmul.f32 %v319, 0.1
  %v576 = vmul.f32 %v430, 0.1
  %v577 = vmul.f32 %v208, 0.1
  %v578 = vmul.f32 %v210, 0.1
  %v579 = vmul.f32 %v321, 0.1
  %v580 = vmul.f32 %v323, 0.1
  %v581 = vmul.f32 %v433, 0.1
  %v582 = vmul.f32 %v214, 0.1
  %v583 = vmul.f32 %v216, 0.1
  %v584 = vmul.f32 %v327, 0.1
  %v585 = vmul.f32 %v329, 0.1
  %v586 = vmul.f32 %v438, 0.1
  %v587 = vmul.f32 %v218, 0.1
  %v588 = vmul.f32 %v220, 0.1
  %v589 = vmul.f32 %v331, 0.1
  %v590 = vmul.f32 %v333, 0.1
  %v591 = vmul.f32 %v441, 0.1
  %v592 = vmul.f32 %v224, 0.1
  %v593 = vmul.f32 %v226, 0.1
  %v594 = vmul.f32 %v337, 0.1
  %v595 = vmul.f32 %v339, 0.1
  %v596 = vmul.f32 %v446, 0.1
  %v597 = vmul.f32 %v228, 0.1
  %v598 = vmul.f32 %v230, 0.1
  %v599 = vmul.f32 %v341, 0.1
  %v600 = vmul.f32 %v343, 0.1
  %v601 = vmul.f32 %v449, 0.1
  %v602 = vmul.f32 %v234, 0.1
  %v603 = vmul.f32 %v236, 0.1
  %v604 = vmul.f32 %v347, 0.1
  %v605 = vmul.f32 %v349, 0.1
  %v606 = vmul.f32 %v454, 0.1
  %v607 = vmul.f32 %v238, 0.1
  %v608 = vmul.f32 %v240, 0.1
  %v609 = vmul.f32 %v351, 0.1
  %v610 = vmul.f32 %v353, 0.1
  %v611 = vmul.f32 %v457, 0.1
  %v612 = vmul.f32 %v244, 0.1
  %v613 = vmul.f32 %v246, 0.1
  %v614 = vmul.f32 %v357, 0.1
  %v615 = vmul.f32 %v359, 0.1
  %v616 = vmul.f32 %v462, 0.1
  %v617 = vmul.f32 %v248, 0.1
  %v618 = vmul.f32 %v250, 0.1
  %v619 = vmul.f32 %v361, 0.1
  %v620 = vmul.f32 %v363, 0.1
  %v621 = vmul.f32 %v465, 0.1
  %v622 = vmul.f32 %v254, 0.1
  %v623 = vmul.f32 %v256, 0.1
  %v624 = vmul.f32 %v367, 0.1
  %v625 = vmul.f32 %v369, 0.1
  %v626 = vmul.f32 %v470, 0.1
  %v627 = vmul.f32 %v258, 0.1
  %v628 = vmul.f32 %v260, 0.1
  %v629 = vmul.f32 %v371, 0.1
  %v630 = vmul.f32 %v373, 0.1
  %v631 = vmul.f32 %v473, 0.1
  %v632 = vmul.f32 %v264, 0.1
  %v633 = vmul.f32 %v266, 0.1
  %v634 = vmul.f32 %v377, 0.1
  %v635 = vmul.f32 %v379, 0.1
  %v636 = vmul.f32 %v478, 0.1
  %v637 = vmul.f32 %v268, 0.1
  %v638 = vmul.f32 %v270, 0.1
  %v639 = vmul.f32 %v381, 0.1
  %v640 = vmul.f32 %v383, 0.1
  %v641 = vmul.f32 %v481, 0.1
  %v642 = vmul.f32 %v274, 0.1
  %v643 = vmul.f32 %v276, 0.1
  %v644 = vmul.f32 %v387, 0.1
  %v645 = vmul.f32 %v389, 0.1
  %v646 = vmul.f32 %v486, 0.1
  %v647 = vmul.f32 %v278, 0.1
  %v648 = vmul.f32 %v280, 0.1
  %v649 = vmul.f32 %v391, 0.1
  %v650 = vmul.f32 %v393, 0.1
  %v651 = vmul.f32 %v489, 0.1
  %v652 = vsel %vm492, %v204, %v572
  %v653 = vsel %vm493, %v206, %v573
  %v654 = vsel %vm494, %v317, %v574
  %v655 = vsel %vm495, %v319, %v575
  %v656 = vsel %vm496, %v430, %v576
  %v657 = vsel %vm497, %v208, %v577
  %v658 = vsel %vm498, %v210, %v578
  %v659 = vsel %vm499, %v321, %v579
  %v660 = vsel %vm500, %v323, %v580
  %v661 = vsel %vm501, %v433, %v581
  %v662 = vsel %vm502, %v214, %v582
  %v663 = vsel %vm503, %v216, %v583
  %v664 = vsel %vm504, %v327, %v584
  %v665 = vsel %vm505, %v329, %v585
  %v666 = vsel %vm506, %v438, %v586
  %v667 = vsel %vm507, %v218, %v587
  %v668 = vsel %vm508, %v220, %v588
  %v669 = vsel %vm509, %v331, %v589
  %v670 = vsel %vm510, %v333, %v590
  %v671 = vsel %vm511, %v441, %v591
  %v672 = vsel %vm512, %v224, %v592
  %v673 = vsel %vm513, %v226, %v593
  %v674 = vsel %vm514, %v337, %v594
  %v675 = vsel %vm515, %v339, %v595
  %v676 = vsel %vm516, %v446, %v596
  %v677 = vsel %vm517, %v228, %v597
  %v678 = vsel %vm518, %v230, %v598
  %v679 = vsel %vm519, %v341, %v599
  %v680 = vsel %vm520, %v343, %v600
  %v681 = vsel %vm521, %v449, %v601
  %v682 = vsel %vm522, %v234, %v602
  %v683 = vsel %vm523, %v236, %v603
  %v684 = vsel %vm524, %v347, %v604
  %v685 = vsel %vm525, %v349, %v605
  %v686 = vsel %vm526, %v454, %v606
  %v687 = vsel %vm527, %v238, %v607
  %v688 = vsel %vm528, %v240, %v608
  %v689 = vsel %vm529, %v351, %v609
  %v690 = vsel %vm530, %v353, %v610
  %v691 = vsel %vm531, %v457, %v611
  %v692 = vsel %vm532, %v244, %v612
  %v693 = vsel %vm533, %v246, %v613
  %v694 = vsel %vm534, %v357, %v614
  %v695 = vsel %vm535, %v359, %v615
  %v696 = vsel %vm536, %v462, %v616
  %v697 = vsel %vm537, %v248, %v617
  %v698 = vsel %vm538, %v250, %v618
  %v699 = vsel %vm539, %v361, %v619
  %v700 = vsel %vm540, %v363, %v620
  %v701 = vsel %vm541, %v465, %v621
  %v702 = vsel %vm542, %v254, %v622
  %v703 = vsel %vm543, %v256, %v623
  %v704 = vsel %vm544, %v367, %v624
  %v705 = vsel %vm545, %v369, %v625
  %v706 = vsel %vm546, %v470, %v626
  %v707 = vsel %vm547, %v258, %v627
  %v708 = vsel %vm548, %v260, %v628
  %v709 = vsel %vm549, %v371, %v629
  %v710 = vsel %vm550, %v373, %v630
  %v711 = vsel %vm551, %v473, %v631
  %v712 = vsel %vm552, %v264, %v632
  %v713 = vsel %vm553, %v266, %v633
  %v714 = vsel %vm554, %v377, %v634
  %v715 = vsel %vm555, %v379, %v635
  %v716 = vsel %vm556, %v478, %v636
  %v717 = vsel %vm557, %v268, %v637
  %v718 = vsel %vm558, %v270, %v638
  %v719 = vsel %vm559, %v381, %v639
  %v720 = vsel %vm560, %v383, %v640
  %v721 = vsel %vm561, %v481, %v641
  %v722 = vsel %vm562, %v274, %v642
  %v723 = vsel %vm563, %v276, %v643
  %v724 = vsel %vm564, %v387, %v644
  %v725 = vsel %vm565, %v389, %v645
  %v726 = vsel %vm566, %v486, %v646
  %v727 = vsel %vm567, %v278, %v647
  %v728 = vsel %vm568, %v280, %v648
  %v729 = vsel %vm569, %v391, %v649
  %v730 = vsel %vm570, %v393, %v650
  %v731 = vsel %vm571, %v489, %v651
  %v732 = vpack.c.bf16 %v657, %v652
  %v733 = vpack.c.bf16 %v658, %v653
  %v734 = vpack.c.bf16 %v659, %v654
  %v735 = vpack.c.bf16 %v660, %v655
  %v736 = vpack.c.bf16 %v661, %v656
  %v737 = vpack.c.bf16 %v667, %v662
  %v738 = vpack.c.bf16 %v668, %v663
  %v739 = vpack.c.bf16 %v669, %v664
  %v740 = vpack.c.bf16 %v670, %v665
  %v741 = vpack.c.bf16 %v671, %v666
  %v742 = vpack.c.bf16 %v677, %v672
  %v743 = vpack.c.bf16 %v678, %v673
  %v744 = vpack.c.bf16 %v679, %v674
  %v745 = vpack.c.bf16 %v680, %v675
  %v746 = vpack.c.bf16 %v681, %v676
  %v747 = vpack.c.bf16 %v687, %v682
  %v748 = vpack.c.bf16 %v688, %v683
  %v749 = vpack.c.bf16 %v689, %v684
  %v750 = vpack.c.bf16 %v690, %v685
  %v751 = vpack.c.bf16 %v691, %v686
  %v752 = vpack.c.bf16 %v697, %v692
  %v753 = vpack.c.bf16 %v698, %v693
  %v754 = vpack.c.bf16 %v699, %v694
  %v755 = vpack.c.bf16 %v700, %v695
  %v756 = vpack.c.bf16 %v701, %v696
  %v757 = vpack.c.bf16 %v707, %v702
  %v758 = vpack.c.bf16 %v708, %v703
  %v759 = vpack.c.bf16 %v709, %v704
  %v760 = vpack.c.bf16 %v710, %v705
  %v761 = vpack.c.bf16 %v711, %v706
  %v762 = vpack.c.bf16 %v717, %v712
  %v763 = vpack.c.bf16 %v718, %v713
  %v764 = vpack.c.bf16 %v719, %v714
  %v765 = vpack.c.bf16 %v720, %v715
  %v766 = vpack.c.bf16 %v721, %v716
  %v767 = vpack.c.bf16 %v727, %v722
  %v768 = vpack.c.bf16 %v728, %v723
  %v769 = vpack.c.bf16 %v729, %v724
  %v770 = vpack.c.bf16 %v730, %v725
  %v771 = vpack.c.bf16 %v731, %v726
  %v772 = vld [vmem:[%s2] sm:$0xf]
  %v773 = vld [vmem:[%s2 + $0x4] sm:$0xf]
  %v774 = vld [vmem:[%s2 + $0x8] sm:$0xf]
  %v775 = vld [vmem:[%s2 + $0xc] sm:$0xf]
  %v776 = vld [vmem:[%s2 + $0x10] sm:$0xf]
  %v777 = vld [vmem:[%s2 + $0x14] sm:$0xf]
  %v778 = vld [vmem:[%s2 + $0x18] sm:$0xf]
  %v779 = vld [vmem:[%s2 + $0x1c] sm:$0xf]
  %v780 = vld [vmem:[%s5] sm:$0xff]
  %v781 = vld [vmem:[%s5 + $0x8] sm:$0xff]
  %v782 = vld [vmem:[%s5 + $0x10] sm:$0xff]
  %v783 = vld [vmem:[%s5 + $0x18] sm:$0xff]
  %v784 = vld [vmem:[%s5 + $0x20] sm:$0xff]
  %v785 = vld [vmem:[%s5 + $0x28] sm:$0xff]
  %v786 = vld [vmem:[%s5 + $0x30] sm:$0xff]
  %v787 = vld [vmem:[%s5 + $0x38] sm:$0xff]
  %789 = vset.pattern.permute.xlu0 0
  %790 = vperm.xlu0 %789, %v780
  %v791 = vpop.permute.xlu0 %790
  %794 = vset.pattern.permute.xlu0 0
  %795 = vperm.xlu0 %794, %v781
  %v796 = vpop.permute.xlu0 %795
  %799 = vset.pattern.permute.xlu0 0
  %800 = vperm.xlu0 %799, %v782
  %v801 = vpop.permute.xlu0 %800
  %804 = vset.pattern.permute.xlu0 0
  %805 = vperm.xlu0 %804, %v783
  %v806 = vpop.permute.xlu0 %805
  %809 = vset.pattern.permute.xlu0 0
  %810 = vperm.xlu0 %809, %v784
  %v811 = vpop.permute.xlu0 %810
  %814 = vset.pattern.permute.xlu0 0
  %815 = vperm.xlu0 %814, %v785
  %v816 = vpop.permute.xlu0 %815
  %819 = vset.pattern.permute.xlu0 0
  %820 = vperm.xlu0 %819, %v786
  %v821 = vpop.permute.xlu0 %820
  %824 = vset.pattern.permute.xlu0 0
  %825 = vperm.xlu0 %824, %v787
  %v826 = vpop.permute.xlu0 %825
  %v836 = vunpack.c.l.b16 %v772
  %v837 = vunpack.c.l.b16 %v773
  %v838 = vunpack.c.l.b16 %v774
  %v839 = vunpack.c.l.b16 %v775
  %v840 = vunpack.c.l.b16 %v776
  %v841 = vunpack.c.l.b16 %v777
  %v842 = vunpack.c.l.b16 %v778
  %v843 = vunpack.c.l.b16 %v779
  %v844 = vpack.c.b16 %v837, %v836
  %v845 = vpack.c.b16 %v839, %v838
  %v846 = vpack.c.b16 %v841, %v840
  %v847 = vpack.c.b16 %v843, %v842
  %852 = vmatprep.subr.bf16.mxu0 %v733
  %853 = vmatpush1.bf16.msra.mxu0 %v732
  %854 = vmatprep.subr.bf16.mxu0 %v738
  %855 = vmatpush1.bf16.msra.mxu0 %v737
  %856 = vmatprep.subr.bf16.mxu0 %v743
  %857 = vmatpush1.bf16.msra.mxu0 %v742
  %858 = vmatprep.subr.bf16.mxu0 %v748
  %859 = vmatpush1.bf16.msra.mxu0 %v747
  %860 = vmatprep.subr.bf16.mxu0 %v753
  %861 = vmatpush1.bf16.msra.mxu0 %v752
  %862 = vmatprep.subr.bf16.mxu0 %v758
  %863 = vmatpush1.bf16.msra.mxu0 %v757
  %864 = vmatprep.subr.bf16.mxu0 %v763
  %865 = vmatpush1.bf16.msra.mxu0 %v762
  %866 = vmatprep.subr.bf16.mxu0 %v768
  %867 = vmatpush1.bf16.msra.mxu0 %v767
  %868 = vmatprep.subr.bf16.mxu0 0
  %869 = vmatpush1.bf16.msra.mxu0 0
  %870 = vmatprep.subr.bf16.mxu0 0
  %871 = vmatpush1.bf16.msra.mxu0 0
  %872 = vmatprep.subr.bf16.mxu0 0
  %873 = vmatpush1.bf16.msra.mxu0 0
  %874 = vmatprep.subr.bf16.mxu0 0
  %875 = vmatpush1.bf16.msra.mxu0 0
  %876 = vmatprep.subr.bf16.mxu0 0
  %877 = vmatpush1.bf16.msra.mxu0 0
  %878 = vmatprep.subr.bf16.mxu0 0
  %879 = vmatpush1.bf16.msra.mxu0 0
  %880 = vmatprep.subr.bf16.mxu0 0
  %881 = vmatpush1.bf16.msra.mxu0 0
  %882 = vmatprep.subr.bf16.mxu0 0
  %883 = vmatpush1.bf16.msra.mxu0 0
  %884 = vmatprep.mubr.bf16.mxu0 0
  %885 = vmatmul.mubr.bf16.gmra.mrb[0].mxu0 %v844
  %v886 = vpop.f32.mrb[0].mxu0
  %v887 = vadd.f32 %v791, %v886
  %v888 = vpop.f32.mrb[0].mxu0
  %v889 = vadd.f32 %v791, %v888
  %v890 = vpop.f32.mrb[0].mxu0
  %v891 = vadd.f32 %v796, %v890
  %v892 = vpop.f32.mrb[0].mxu0
  %v893 = vadd.f32 %v796, %v892
  %894 = vmatprep.mubr.bf16.mxu0 0
  %895 = vmatmul.mubr.bf16.gmra.mrb[0].mxu0 %v845
  %v896 = vpop.f32.mrb[0].mxu0
  %v897 = vadd.f32 %v801, %v896
  %v898 = vpop.f32.mrb[0].mxu0
  %v899 = vadd.f32 %v801, %v898
  %v900 = vpop.f32.mrb[0].mxu0
  %v901 = vadd.f32 %v806, %v900
  %v902 = vpop.f32.mrb[0].mxu0
  %v903 = vadd.f32 %v806, %v902
  %904 = vmatprep.mubr.bf16.mxu0 0
  %905 = vmatmul.mubr.bf16.gmra.mrb[0].mxu0 %v846
  %v906 = vpop.f32.mrb[0].mxu0
  %v907 = vadd.f32 %v811, %v906
  %v908 = vpop.f32.mrb[0].mxu0
  %v909 = vadd.f32 %v811, %v908
  %v910 = vpop.f32.mrb[0].mxu0
  %v911 = vadd.f32 %v816, %v910
  %v912 = vpop.f32.mrb[0].mxu0
  %v913 = vadd.f32 %v816, %v912
  %914 = vmatprep.mubr.bf16.mxu0 0
  %915 = vmatmul.mubr.bf16.gmra.mrb[0].mxu0 %v847
  %v916 = vpop.f32.mrb[0].mxu0
  %v917 = vadd.f32 %v821, %v916
  %v918 = vpop.f32.mrb[0].mxu0
  %v919 = vadd.f32 %v821, %v918
  %v920 = vpop.f32.mrb[0].mxu0
  %v921 = vadd.f32 %v826, %v920
  %v922 = vpop.f32.mrb[0].mxu0
  %v923 = vadd.f32 %v826, %v922
  %924 = vdwg.mxu0
  %925 = vmatprep.subr.bf16.mxu0 %v735
  %926 = vmatpush1.bf16.msra.mxu0 %v734
  %927 = vmatprep.subr.bf16.mxu0 %v740
  %928 = vmatpush1.bf16.msra.mxu0 %v739
  %929 = vmatprep.subr.bf16.mxu0 %v745
  %930 = vmatpush1.bf16.msra.mxu0 %v744
  %931 = vmatprep.subr.bf16.mxu0 %v750
  %932 = vmatpush1.bf16.msra.mxu0 %v749
  %933 = vmatprep.subr.bf16.mxu0 %v755
  %934 = vmatpush1.bf16.msra.mxu0 %v754
  %935 = vmatprep.subr.bf16.mxu0 %v760
  %936 = vmatpush1.bf16.msra.mxu0 %v759
  %937 = vmatprep.subr.bf16.mxu0 %v765
  %938 = vmatpush1.bf16.msra.mxu0 %v764
  %939 = vmatprep.subr.bf16.mxu0 %v770
  %940 = vmatpush1.bf16.msra.mxu0 %v769
  %941 = vmatprep.subr.bf16.mxu0 0
  %942 = vmatpush1.bf16.msra.mxu0 0
  %943 = vmatprep.subr.bf16.mxu0 0
  %944 = vmatpush1.bf16.msra.mxu0 0
  %945 = vmatprep.subr.bf16.mxu0 0
  %946 = vmatpush1.bf16.msra.mxu0 0
  %947 = vmatprep.subr.bf16.mxu0 0
  %948 = vmatpush1.bf16.msra.mxu0 0
  %949 = vmatprep.subr.bf16.mxu0 0
  %950 = vmatpush1.bf16.msra.mxu0 0
  %951 = vmatprep.subr.bf16.mxu0 0
  %952 = vmatpush1.bf16.msra.mxu0 0
  %953 = vmatprep.subr.bf16.mxu0 0
  %954 = vmatpush1.bf16.msra.mxu0 0
  %955 = vmatprep.subr.bf16.mxu0 0
  %956 = vmatpush1.bf16.msra.mxu0 0
  %957 = vmatprep.mubr.bf16.mxu0 0
  %958 = vmatmul.mubr.bf16.gmra.mrb[0].mxu0 %v844
  %v959 = vpop.f32.mrb[0].mxu0
  %v960 = vadd.f32 %v791, %v959
  %v961 = vpop.f32.mrb[0].mxu0
  %v962 = vadd.f32 %v791, %v961
  %v963 = vpop.f32.mrb[0].mxu0
  %v964 = vadd.f32 %v796, %v963
  %v965 = vpop.f32.mrb[0].mxu0
  %v966 = vadd.f32 %v796, %v965
  %967 = vmatprep.mubr.bf16.mxu0 0
  %968 = vmatmul.mubr.bf16.gmra.mrb[0].mxu0 %v845
  %v969 = vpop.f32.mrb[0].mxu0
  %v970 = vadd.f32 %v801, %v969
  %v971 = vpop.f32.mrb[0].mxu0
  %v972 = vadd.f32 %v801, %v971
  %v973 = vpop.f32.mrb[0].mxu0
  %v974 = vadd.f32 %v806, %v973
  %v975 = vpop.f32.mrb[0].mxu0
  %v976 = vadd.f32 %v806, %v975
  %977 = vmatprep.mubr.bf16.mxu0 0
  %978 = vmatmul.mubr.bf16.gmra.mrb[0].mxu0 %v846
  %v979 = vpop.f32.mrb[0].mxu0
  %v980 = vadd.f32 %v811, %v979
  %v981 = vpop.f32.mrb[0].mxu0
  %v982 = vadd.f32 %v811, %v981
  %v983 = vpop.f32.mrb[0].mxu0
  %v984 = vadd.f32 %v816, %v983
  %v985 = vpop.f32.mrb[0].mxu0
  %v986 = vadd.f32 %v816, %v985
  %987 = vmatprep.mubr.bf16.mxu0 0
  %988 = vmatmul.mubr.bf16.gmra.mrb[0].mxu0 %v847
  %v989 = vpop.f32.mrb[0].mxu0
  %v990 = vadd.f32 %v821, %v989
  %v991 = vpop.f32.mrb[0].mxu0
  %v992 = vadd.f32 %v821, %v991
  %v993 = vpop.f32.mrb[0].mxu0
  %v994 = vadd.f32 %v826, %v993
  %v995 = vpop.f32.mrb[0].mxu0
  %v996 = vadd.f32 %v826, %v995
  %997 = vdwg.mxu0
  %998 = vmatprep.subr.bf16.mxu0 0
  %999 = vmatpush1.bf16.msra.mxu0 %v736
  %1000 = vmatprep.subr.bf16.mxu0 0
  %1001 = vmatpush1.bf16.msra.mxu0 %v741
  %1002 = vmatprep.subr.bf16.mxu0 0
  %1003 = vmatpush1.bf16.msra.mxu0 %v746
  %1004 = vmatprep.subr.bf16.mxu0 0
  %1005 = vmatpush1.bf16.msra.mxu0 %v751
  %1006 = vmatprep.subr.bf16.mxu0 0
  %1007 = vmatpush1.bf16.msra.mxu0 %v756
  %1008 = vmatprep.subr.bf16.mxu0 0
  %1009 = vmatpush1.bf16.msra.mxu0 %v761
  %1010 = vmatprep.subr.bf16.mxu0 0
  %1011 = vmatpush1.bf16.msra.mxu0 %v766
  %1012 = vmatprep.subr.bf16.mxu0 0
  %1013 = vmatpush1.bf16.msra.mxu0 %v771
  %1014 = vmatprep.subr.bf16.mxu0 0
  %1015 = vmatpush1.bf16.msra.mxu0 0
  %1016 = vmatprep.subr.bf16.mxu0 0
  %1017 = vmatpush1.bf16.msra.mxu0 0
  %1018 = vmatprep.subr.bf16.mxu0 0
  %1019 = vmatpush1.bf16.msra.mxu0 0
  %1020 = vmatprep.subr.bf16.mxu0 0
  %1021 = vmatpush1.bf16.msra.mxu0 0
  %1022 = vmatprep.subr.bf16.mxu0 0
  %1023 = vmatpush1.bf16.msra.mxu0 0
  %1024 = vmatprep.subr.bf16.mxu0 0
  %1025 = vmatpush1.bf16.msra.mxu0 0
  %1026 = vmatprep.subr.bf16.mxu0 0
  %1027 = vmatpush1.bf16.msra.mxu0 0
  %1028 = vmatprep.subr.bf16.mxu0 0
  %1029 = vmatpush1.bf16.msra.mxu0 0
  %1030 = vmatprep.mubr.bf16.mxu0 0
  %1031 = vmatmul.mubr.bf16.gmra.mrb[0].mxu0 %v844
  %v1032 = vpop.f32.mrb[0].mxu0
  %v1033 = vadd.f32 %v791, %v1032
  %v1034 = vpop.f32.mrb[0].mxu0
  %v1035 = vpop.f32.mrb[0].mxu0
  %v1036 = vadd.f32 %v796, %v1035
  %v1037 = vpop.f32.mrb[0].mxu0
  %1038 = vmatprep.mubr.bf16.mxu0 0
  %1039 = vmatmul.mubr.bf16.gmra.mrb[0].mxu0 %v845
  %v1040 = vpop.f32.mrb[0].mxu0
  %v1041 = vadd.f32 %v801, %v1040
  %v1042 = vpop.f32.mrb[0].mxu0
  %v1043 = vpop.f32.mrb[0].mxu0
  %v1044 = vadd.f32 %v806, %v1043
  %v1045 = vpop.f32.mrb[0].mxu0
  %1046 = vmatprep.mubr.bf16.mxu0 0
  %1047 = vmatmul.mubr.bf16.gmra.mrb[0].mxu0 %v846
  %v1048 = vpop.f32.mrb[0].mxu0
  %v1049 = vadd.f32 %v811, %v1048
  %v1050 = vpop.f32.mrb[0].mxu0
  %v1051 = vpop.f32.mrb[0].mxu0
  %v1052 = vadd.f32 %v816, %v1051
  %v1053 = vpop.f32.mrb[0].mxu0
  %1054 = vmatprep.mubr.bf16.mxu0 0
  %1055 = vmatmul.mubr.bf16.gmra.mrb[0].mxu0 %v847
  %v1056 = vpop.f32.mrb[0].mxu0
  %v1057 = vadd.f32 %v821, %v1056
  %v1058 = vpop.f32.mrb[0].mxu0
  %v1059 = vpop.f32.mrb[0].mxu0
  %v1060 = vadd.f32 %v826, %v1059
  %v1061 = vpop.f32.mrb[0].mxu0
  %1062 = vdwg.mxu0
  %vm1063 = vcmp.gt.f32.partialorder %v887, 0.0
  %vm1064 = vcmp.gt.f32.partialorder %v889, 0.0
  %vm1065 = vcmp.gt.f32.partialorder %v960, 0.0
  %vm1066 = vcmp.gt.f32.partialorder %v962, 0.0
  %vm1067 = vcmp.gt.f32.partialorder %v1033, 0.0
  %vm1068 = vcmp.gt.f32.partialorder %v891, 0.0
  %vm1069 = vcmp.gt.f32.partialorder %v893, 0.0
  %vm1070 = vcmp.gt.f32.partialorder %v964, 0.0
  %vm1071 = vcmp.gt.f32.partialorder %v966, 0.0
  %vm1072 = vcmp.gt.f32.partialorder %v1036, 0.0
  %vm1073 = vcmp.gt.f32.partialorder %v897, 0.0
  %vm1074 = vcmp.gt.f32.partialorder %v899, 0.0
  %vm1075 = vcmp.gt.f32.partialorder %v970, 0.0
  %vm1076 = vcmp.gt.f32.partialorder %v972, 0.0
  %vm1077 = vcmp.gt.f32.partialorder %v1041, 0.0
  %vm1078 = vcmp.gt.f32.partialorder %v901, 0.0
  %vm1079 = vcmp.gt.f32.partialorder %v903, 0.0
  %vm1080 = vcmp.gt.f32.partialorder %v974, 0.0
  %vm1081 = vcmp.gt.f32.partialorder %v976, 0.0
  %vm1082 = vcmp.gt.f32.partialorder %v1044, 0.0
  %vm1083 = vcmp.gt.f32.partialorder %v907, 0.0
  %vm1084 = vcmp.gt.f32.partialorder %v909, 0.0
  %vm1085 = vcmp.gt.f32.partialorder %v980, 0.0
  %vm1086 = vcmp.gt.f32.partialorder %v982, 0.0
  %vm1087 = vcmp.gt.f32.partialorder %v1049, 0.0
  %vm1088 = vcmp.gt.f32.partialorder %v911, 0.0
  %vm1089 = vcmp.gt.f32.partialorder %v913, 0.0
  %vm1090 = vcmp.gt.f32.partialorder %v984, 0.0
  %vm1091 = vcmp.gt.f32.partialorder %v986, 0.0
  %vm1092 = vcmp.gt.f32.partialorder %v1052, 0.0
  %vm1093 = vcmp.gt.f32.partialorder %v917, 0.0
  %vm1094 = vcmp.gt.f32.partialorder %v919, 0.0
  %vm1095 = vcmp.gt.f32.partialorder %v990, 0.0
  %vm1096 = vcmp.gt.f32.partialorder %v992, 0.0
  %vm1097 = vcmp.gt.f32.partialorder %v1057, 0.0
  %vm1098 = vcmp.gt.f32.partialorder %v921, 0.0
  %vm1099 = vcmp.gt.f32.partialorder %v923, 0.0
  %vm1100 = vcmp.gt.f32.partialorder %v994, 0.0
  %vm1101 = vcmp.gt.f32.partialorder %v996, 0.0
  %vm1102 = vcmp.gt.f32.partialorder %v1060, 0.0
  %v1103 = vmul.f32 %v887, 0.1
  %v1104 = vmul.f32 %v889, 0.1
  %v1105 = vmul.f32 %v960, 0.1
  %v1106 = vmul.f32 %v962, 0.1
  %v1107 = vmul.f32 %v1033, 0.1
  %v1108 = vmul.f32 %v891, 0.1
  %v1109 = vmul.f32 %v893, 0.1
  %v1110 = vmul.f32 %v964, 0.1
  %v1111 = vmul.f32 %v966, 0.1
  %v1112 = vmul.f32 %v1036, 0.1
  %v1113 = vmul.f32 %v897, 0.1
  %v1114 = vmul.f32 %v899, 0.1
  %v1115 = vmul.f32 %v970, 0.1
  %v1116 = vmul.f32 %v972, 0.1
  %v1117 = vmul.f32 %v1041, 0.1
  %v1118 = vmul.f32 %v901, 0.1
  %v1119 = vmul.f32 %v903, 0.1
  %v1120 = vmul.f32 %v974, 0.1
  %v1121 = vmul.f32 %v976, 0.1
  %v1122 = vmul.f32 %v1044, 0.1
  %v1123 = vmul.f32 %v907, 0.1
  %v1124 = vmul.f32 %v909, 0.1
  %v1125 = vmul.f32 %v980, 0.1
  %v1126 = vmul.f32 %v982, 0.1
  %v1127 = vmul.f32 %v1049, 0.1
  %v1128 = vmul.f32 %v911, 0.1
  %v1129 = vmul.f32 %v913, 0.1
  %v1130 = vmul.f32 %v984, 0.1
  %v1131 = vmul.f32 %v986, 0.1
  %v1132 = vmul.f32 %v1052, 0.1
  %v1133 = vmul.f32 %v917, 0.1
  %v1134 = vmul.f32 %v919, 0.1
  %v1135 = vmul.f32 %v990, 0.1
  %v1136 = vmul.f32 %v992, 0.1
  %v1137 = vmul.f32 %v1057, 0.1
  %v1138 = vmul.f32 %v921, 0.1
  %v1139 = vmul.f32 %v923, 0.1
  %v1140 = vmul.f32 %v994, 0.1
  %v1141 = vmul.f32 %v996, 0.1
  %v1142 = vmul.f32 %v1060, 0.1
  %v1143 = vsel %vm1063, %v887, %v1103
  %v1144 = vsel %vm1064, %v889, %v1104
  %v1145 = vsel %vm1065, %v960, %v1105
  %v1146 = vsel %vm1066, %v962, %v1106
  %v1147 = vsel %vm1067, %v1033, %v1107
  %v1148 = vsel %vm1068, %v891, %v1108
  %v1149 = vsel %vm1069, %v893, %v1109
  %v1150 = vsel %vm1070, %v964, %v1110
  %v1151 = vsel %vm1071, %v966, %v1111
  %v1152 = vsel %vm1072, %v1036, %v1112
  %v1153 = vsel %vm1073, %v897, %v1113
  %v1154 = vsel %vm1074, %v899, %v1114
  %v1155 = vsel %vm1075, %v970, %v1115
  %v1156 = vsel %vm1076, %v972, %v1116
  %v1157 = vsel %vm1077, %v1041, %v1117
  %v1158 = vsel %vm1078, %v901, %v1118
  %v1159 = vsel %vm1079, %v903, %v1119
  %v1160 = vsel %vm1080, %v974, %v1120
  %v1161 = vsel %vm1081, %v976, %v1121
  %v1162 = vsel %vm1082, %v1044, %v1122
  %v1163 = vsel %vm1083, %v907, %v1123
  %v1164 = vsel %vm1084, %v909, %v1124
  %v1165 = vsel %vm1085, %v980, %v1125
  %v1166 = vsel %vm1086, %v982, %v1126
  %v1167 = vsel %vm1087, %v1049, %v1127
  %v1168 = vsel %vm1088, %v911, %v1128
  %v1169 = vsel %vm1089, %v913, %v1129
  %v1170 = vsel %vm1090, %v984, %v1130
  %v1171 = vsel %vm1091, %v986, %v1131
  %v1172 = vsel %vm1092, %v1052, %v1132
  %v1173 = vsel %vm1093, %v917, %v1133
  %v1174 = vsel %vm1094, %v919, %v1134
  %v1175 = vsel %vm1095, %v990, %v1135
  %v1176 = vsel %vm1096, %v992, %v1136
  %v1177 = vsel %vm1097, %v1057, %v1137
  %v1178 = vsel %vm1098, %v921, %v1138
  %v1179 = vsel %vm1099, %v923, %v1139
  %v1180 = vsel %vm1100, %v994, %v1140
  %v1181 = vsel %vm1101, %v996, %v1141
  %v1182 = vsel %vm1102, %v1060, %v1142
  %v1183 = vpack.c.bf16 %v1148, %v1143
  %v1184 = vpack.c.bf16 %v1149, %v1144
  %v1185 = vpack.c.bf16 %v1150, %v1145
  %v1186 = vpack.c.bf16 %v1151, %v1146
  %v1187 = vpack.c.bf16 %v1152, %v1147
  %v1188 = vpack.c.bf16 %v1158, %v1153
  %v1189 = vpack.c.bf16 %v1159, %v1154
  %v1190 = vpack.c.bf16 %v1160, %v1155
  %v1191 = vpack.c.bf16 %v1161, %v1156
  %v1192 = vpack.c.bf16 %v1162, %v1157
  %v1193 = vpack.c.bf16 %v1168, %v1163
  %v1194 = vpack.c.bf16 %v1169, %v1164
  %v1195 = vpack.c.bf16 %v1170, %v1165
  %v1196 = vpack.c.bf16 %v1171, %v1166
  %v1197 = vpack.c.bf16 %v1172, %v1167
  %v1198 = vpack.c.bf16 %v1178, %v1173
  %v1199 = vpack.c.bf16 %v1179, %v1174
  %v1200 = vpack.c.bf16 %v1180, %v1175
  %v1201 = vpack.c.bf16 %v1181, %v1176
  %v1202 = vpack.c.bf16 %v1182, %v1177
  %v1203 = vld [vmem:[%s3] sm:$0xf]
  %v1204 = vld [vmem:[%s3 + $0x4] sm:$0xf]
  %v1205 = vld [vmem:[%s3 + $0x8] sm:$0xf]
  %v1206 = vld [vmem:[%s3 + $0xc] sm:$0xf]
  %v1207 = vld [vmem:[%s5] sm:$0xff]
  %v1208 = vld [vmem:[%s5 + $0x8] sm:$0xff]
  %v1209 = vld [vmem:[%s5 + $0x10] sm:$0xff]
  %v1210 = vld [vmem:[%s5 + $0x18] sm:$0xff]
  %1212 = vset.pattern.permute.xlu0 1
  %1213 = vperm.xlu0 %1212, %v1207
  %v1214 = vpop.permute.xlu0 %1213
  %1217 = vset.pattern.permute.xlu0 1
  %1218 = vperm.xlu0 %1217, %v1208
  %v1219 = vpop.permute.xlu0 %1218
  %1222 = vset.pattern.permute.xlu0 1
  %1223 = vperm.xlu0 %1222, %v1209
  %v1224 = vpop.permute.xlu0 %1223
  %1227 = vset.pattern.permute.xlu0 1
  %1228 = vperm.xlu0 %1227, %v1210
  %v1229 = vpop.permute.xlu0 %1228
  %v1235 = vunpack.c.l.b16 %v1203
  %v1236 = vunpack.c.l.b16 %v1204
  %v1237 = vunpack.c.l.b16 %v1205
  %v1238 = vunpack.c.l.b16 %v1206
  %v1239 = vpack.c.b16 %v1236, %v1235
  %v1240 = vpack.c.b16 %v1238, %v1237
  %vm1241 = vcmask 523264
  %v1243 = vsel %vm1241, %v1239, 0
  %v1246 = vsel %vm1241, %v1240, 0
  %1248 = vmatprep.subr.bf16.mxu0 %v1184
  %1249 = vmatpush1.bf16.msra.mxu0 %v1183
  %1250 = vmatprep.subr.bf16.mxu0 %v1189
  %1251 = vmatpush1.bf16.msra.mxu0 %v1188
  %1252 = vmatprep.subr.bf16.mxu0 %v1194
  %1253 = vmatpush1.bf16.msra.mxu0 %v1193
  %1254 = vmatprep.subr.bf16.mxu0 %v1199
  %1255 = vmatpush1.bf16.msra.mxu0 %v1198
  %1256 = vmatprep.subr.bf16.mxu0 0
  %1257 = vmatpush1.bf16.msra.mxu0 0
  %1258 = vmatprep.subr.bf16.mxu0 0
  %1259 = vmatpush1.bf16.msra.mxu0 0
  %1260 = vmatprep.subr.bf16.mxu0 0
  %1261 = vmatpush1.bf16.msra.mxu0 0
  %1262 = vmatprep.subr.bf16.mxu0 0
  %1263 = vmatpush1.bf16.msra.mxu0 0
  %1264 = vmatprep.subr.bf16.mxu0 0
  %1265 = vmatpush1.bf16.msra.mxu0 0
  %1266 = vmatprep.subr.bf16.mxu0 0
  %1267 = vmatpush1.bf16.msra.mxu0 0
  %1268 = vmatprep.subr.bf16.mxu0 0
  %1269 = vmatpush1.bf16.msra.mxu0 0
  %1270 = vmatprep.subr.bf16.mxu0 0
  %1271 = vmatpush1.bf16.msra.mxu0 0
  %1272 = vmatprep.subr.bf16.mxu0 0
  %1273 = vmatpush1.bf16.msra.mxu0 0
  %1274 = vmatprep.subr.bf16.mxu0 0
  %1275 = vmatpush1.bf16.msra.mxu0 0
  %1276 = vmatprep.subr.bf16.mxu0 0
  %1277 = vmatpush1.bf16.msra.mxu0 0
  %1278 = vmatprep.subr.bf16.mxu0 0
  %1279 = vmatpush1.bf16.msra.mxu0 0
  %1280 = vmatprep.mubr.bf16.mxu0 0
  %1281 = vmatmul.mubr.bf16.gmra.mrb[0].mxu0 %v1243
  %v1282 = vpop.f32.mrb[0].mxu0
  %v1283 = vadd.f32 %v1214, %v1282
  %v1284 = vpop.f32.mrb[0].mxu0
  %v1285 = vadd.f32 %v1214, %v1284
  %v1286 = vpop.f32.mrb[0].mxu0
  %v1287 = vadd.f32 %v1219, %v1286
  %v1288 = vpop.f32.mrb[0].mxu0
  %v1289 = vadd.f32 %v1219, %v1288
  %1290 = vmatprep.mubr.bf16.mxu0 0
  %1291 = vmatmul.mubr.bf16.gmra.mrb[0].mxu0 %v1246
  %v1292 = vpop.f32.mrb[0].mxu0
  %v1293 = vadd.f32 %v1224, %v1292
  %v1294 = vpop.f32.mrb[0].mxu0
  %v1295 = vadd.f32 %v1224, %v1294
  %v1296 = vpop.f32.mrb[0].mxu0
  %v1297 = vadd.f32 %v1229, %v1296
  %v1298 = vpop.f32.mrb[0].mxu0
  %v1299 = vadd.f32 %v1229, %v1298
  %1300 = vdwg.mxu0
  %1301 = vmatprep.subr.bf16.mxu0 %v1186
  %1302 = vmatpush1.bf16.msra.mxu0 %v1185
  %1303 = vmatprep.subr.bf16.mxu0 %v1191
  %1304 = vmatpush1.bf16.msra.mxu0 %v1190
  %1305 = vmatprep.subr.bf16.mxu0 %v1196
  %1306 = vmatpush1.bf16.msra.mxu0 %v1195
  %1307 = vmatprep.subr.bf16.mxu0 %v1201
  %1308 = vmatpush1.bf16.msra.mxu0 %v1200
  %1309 = vmatprep.subr.bf16.mxu0 0
  %1310 = vmatpush1.bf16.msra.mxu0 0
  %1311 = vmatprep.subr.bf16.mxu0 0
  %1312 = vmatpush1.bf16.msra.mxu0 0
  %1313 = vmatprep.subr.bf16.mxu0 0
  %1314 = vmatpush1.bf16.msra.mxu0 0
  %1315 = vmatprep.subr.bf16.mxu0 0
  %1316 = vmatpush1.bf16.msra.mxu0 0
  %1317 = vmatprep.subr.bf16.mxu0 0
  %1318 = vmatpush1.bf16.msra.mxu0 0
  %1319 = vmatprep.subr.bf16.mxu0 0
  %1320 = vmatpush1.bf16.msra.mxu0 0
  %1321 = vmatprep.subr.bf16.mxu0 0
  %1322 = vmatpush1.bf16.msra.mxu0 0
  %1323 = vmatprep.subr.bf16.mxu0 0
  %1324 = vmatpush1.bf16.msra.mxu0 0
  %1325 = vmatprep.subr.bf16.mxu0 0
  %1326 = vmatpush1.bf16.msra.mxu0 0
  %1327 = vmatprep.subr.bf16.mxu0 0
  %1328 = vmatpush1.bf16.msra.mxu0 0
  %1329 = vmatprep.subr.bf16.mxu0 0
  %1330 = vmatpush1.bf16.msra.mxu0 0
  %1331 = vmatprep.subr.bf16.mxu0 0
  %1332 = vmatpush1.bf16.msra.mxu0 0
  %1333 = vmatprep.mubr.bf16.mxu0 0
  %1334 = vmatmul.mubr.bf16.gmra.mrb[0].mxu0 %v1243
  %v1335 = vpop.f32.mrb[0].mxu0
  %v1336 = vadd.f32 %v1214, %v1335
  %v1337 = vpop.f32.mrb[0].mxu0
  %v1338 = vadd.f32 %v1214, %v1337
  %v1339 = vpop.f32.mrb[0].mxu0
  %v1340 = vadd.f32 %v1219, %v1339
  %v1341 = vpop.f32.mrb[0].mxu0
  %v1342 = vadd.f32 %v1219, %v1341
  %1343 = vmatprep.mubr.bf16.mxu0 0
  %1344 = vmatmul.mubr.bf16.gmra.mrb[0].mxu0 %v1246
  %v1345 = vpop.f32.mrb[0].mxu0
  %v1346 = vadd.f32 %v1224, %v1345
  %v1347 = vpop.f32.mrb[0].mxu0
  %v1348 = vadd.f32 %v1224, %v1347
  %v1349 = vpop.f32.mrb[0].mxu0
  %v1350 = vadd.f32 %v1229, %v1349
  %v1351 = vpop.f32.mrb[0].mxu0
  %v1352 = vadd.f32 %v1229, %v1351
  %1353 = vdwg.mxu0
  %1354 = vmatprep.subr.bf16.mxu0 0
  %1355 = vmatpush1.bf16.msra.mxu0 %v1187
  %1356 = vmatprep.subr.bf16.mxu0 0
  %1357 = vmatpush1.bf16.msra.mxu0 %v1192
  %1358 = vmatprep.subr.bf16.mxu0 0
  %1359 = vmatpush1.bf16.msra.mxu0 %v1197
  %1360 = vmatprep.subr.bf16.mxu0 0
  %1361 = vmatpush1.bf16.msra.mxu0 %v1202
  %1362 = vmatprep.subr.bf16.mxu0 0
  %1363 = vmatpush1.bf16.msra.mxu0 0
  %1364 = vmatprep.subr.bf16.mxu0 0
  %1365 = vmatpush1.bf16.msra.mxu0 0
  %1366 = vmatprep.subr.bf16.mxu0 0
  %1367 = vmatpush1.bf16.msra.mxu0 0
  %1368 = vmatprep.subr.bf16.mxu0 0
  %1369 = vmatpush1.bf16.msra.mxu0 0
  %1370 = vmatprep.subr.bf16.mxu0 0
  %1371 = vmatpush1.bf16.msra.mxu0 0
  %1372 = vmatprep.subr.bf16.mxu0 0
  %1373 = vmatpush1.bf16.msra.mxu0 0
  %1374 = vmatprep.subr.bf16.mxu0 0
  %1375 = vmatpush1.bf16.msra.mxu0 0
  %1376 = vmatprep.subr.bf16.mxu0 0
  %1377 = vmatpush1.bf16.msra.mxu0 0
  %1378 = vmatprep.subr.bf16.mxu0 0
  %1379 = vmatpush1.bf16.msra.mxu0 0
  %1380 = vmatprep.subr.bf16.mxu0 0
  %1381 = vmatpush1.bf16.msra.mxu0 0
  %1382 = vmatprep.subr.bf16.mxu0 0
  %1383 = vmatpush1.bf16.msra.mxu0 0
  %1384 = vmatprep.subr.bf16.mxu0 0
  %1385 = vmatpush1.bf16.msra.mxu0 0
  %1386 = vmatprep.mubr.bf16.mxu0 0
  %1387 = vmatmul.mubr.bf16.gmra.mrb[0].mxu0 %v1243
  %v1388 = vpop.f32.mrb[0].mxu0
  %v1389 = vadd.f32 %v1214, %v1388
  %v1390 = vpop.f32.mrb[0].mxu0
  %v1391 = vpop.f32.mrb[0].mxu0
  %v1392 = vadd.f32 %v1219, %v1391
  %v1393 = vpop.f32.mrb[0].mxu0
  %1394 = vmatprep.mubr.bf16.mxu0 0
  %1395 = vmatmul.mubr.bf16.gmra.mrb[0].mxu0 %v1246
  %v1396 = vpop.f32.mrb[0].mxu0
  %v1397 = vadd.f32 %v1224, %v1396
  %v1398 = vpop.f32.mrb[0].mxu0
  %v1399 = vpop.f32.mrb[0].mxu0
  %v1400 = vadd.f32 %v1229, %v1399
  %v1401 = vpop.f32.mrb[0].mxu0
  %1402 = vdwg.mxu0
  %vm1403 = vcmp.gt.f32.partialorder %v1283, 0.0
  %vm1404 = vcmp.gt.f32.partialorder %v1285, 0.0
  %vm1405 = vcmp.gt.f32.partialorder %v1336, 0.0
  %vm1406 = vcmp.gt.f32.partialorder %v1338, 0.0
  %vm1407 = vcmp.gt.f32.partialorder %v1389, 0.0
  %vm1408 = vcmp.gt.f32.partialorder %v1287, 0.0
  %vm1409 = vcmp.gt.f32.partialorder %v1289, 0.0
  %vm1410 = vcmp.gt.f32.partialorder %v1340, 0.0
  %vm1411 = vcmp.gt.f32.partialorder %v1342, 0.0
  %vm1412 = vcmp.gt.f32.partialorder %v1392, 0.0
  %vm1413 = vcmp.gt.f32.partialorder %v1293, 0.0
  %vm1414 = vcmp.gt.f32.partialorder %v1295, 0.0
  %vm1415 = vcmp.gt.f32.partialorder %v1346, 0.0
  %vm1416 = vcmp.gt.f32.partialorder %v1348, 0.0
  %vm1417 = vcmp.gt.f32.partialorder %v1397, 0.0
  %vm1418 = vcmp.gt.f32.partialorder %v1297, 0.0
  %vm1419 = vcmp.gt.f32.partialorder %v1299, 0.0
  %vm1420 = vcmp.gt.f32.partialorder %v1350, 0.0
  %vm1421 = vcmp.gt.f32.partialorder %v1352, 0.0
  %vm1422 = vcmp.gt.f32.partialorder %v1400, 0.0
  %v1423 = vmul.f32 %v1283, 0.1
  %v1424 = vmul.f32 %v1285, 0.1
  %v1425 = vmul.f32 %v1336, 0.1
  %v1426 = vmul.f32 %v1338, 0.1
  %v1427 = vmul.f32 %v1389, 0.1
  %v1428 = vmul.f32 %v1287, 0.1
  %v1429 = vmul.f32 %v1289, 0.1
  %v1430 = vmul.f32 %v1340, 0.1
  %v1431 = vmul.f32 %v1342, 0.1
  %v1432 = vmul.f32 %v1392, 0.1
  %v1433 = vmul.f32 %v1293, 0.1
  %v1434 = vmul.f32 %v1295, 0.1
  %v1435 = vmul.f32 %v1346, 0.1
  %v1436 = vmul.f32 %v1348, 0.1
  %v1437 = vmul.f32 %v1397, 0.1
  %v1438 = vmul.f32 %v1297, 0.1
  %v1439 = vmul.f32 %v1299, 0.1
  %v1440 = vmul.f32 %v1350, 0.1
  %v1441 = vmul.f32 %v1352, 0.1
  %v1442 = vmul.f32 %v1400, 0.1
  %v1443 = vsel %vm1403, %v1283, %v1423
  %v1444 = vsel %vm1404, %v1285, %v1424
  %v1445 = vsel %vm1405, %v1336, %v1425
  %v1446 = vsel %vm1406, %v1338, %v1426
  %v1447 = vsel %vm1407, %v1389, %v1427
  %v1448 = vsel %vm1408, %v1287, %v1428
  %v1449 = vsel %vm1409, %v1289, %v1429
  %v1450 = vsel %vm1410, %v1340, %v1430
  %v1451 = vsel %vm1411, %v1342, %v1431
  %v1452 = vsel %vm1412, %v1392, %v1432
  %v1453 = vsel %vm1413, %v1293, %v1433
  %v1454 = vsel %vm1414, %v1295, %v1434
  %v1455 = vsel %vm1415, %v1346, %v1435
  %v1456 = vsel %vm1416, %v1348, %v1436
  %v1457 = vsel %vm1417, %v1397, %v1437
  %v1458 = vsel %vm1418, %v1297, %v1438
  %v1459 = vsel %vm1419, %v1299, %v1439
  %v1460 = vsel %vm1420, %v1350, %v1440
  %v1461 = vsel %vm1421, %v1352, %v1441
  %v1462 = vsel %vm1422, %v1400, %v1442
  %v1463 = vpack.c.bf16 %v1448, %v1443
  %v1464 = vpack.c.bf16 %v1449, %v1444
  %v1465 = vpack.c.bf16 %v1450, %v1445
  %v1466 = vpack.c.bf16 %v1451, %v1446
  %v1467 = vpack.c.bf16 %v1452, %v1447
  %v1468 = vpack.c.bf16 %v1458, %v1453
  %v1469 = vpack.c.bf16 %v1459, %v1454
  %v1470 = vpack.c.bf16 %v1460, %v1455
  %v1471 = vpack.c.bf16 %v1461, %v1456
  %v1472 = vpack.c.bf16 %v1462, %v1457
  %v1473 = vld [vmem:[%s4] sm:$0x1]
  %v1474 = vld [vmem:[%s5] sm:$0x1]
  %1476 = vset.pattern.permute.xlu0 2
  %1477 = vperm.xlu0 %1476, %v1474
  %v1478 = vpop.permute.xlu0 %1477
  %v1481 = vsel %vm144, %v1473, 0
  %1483 = vmatprep.subr.bf16.mxu0 %v1464
  %1484 = vmatpush1.bf16.msra.mxu0 %v1463
  %1485 = vmatprep.subr.bf16.mxu0 %v1469
  %1486 = vmatpush1.bf16.msra.mxu0 %v1468
  %1487 = vmatprep.subr.bf16.mxu0 0
  %1488 = vmatpush1.bf16.msra.mxu0 0
  %1489 = vmatprep.subr.bf16.mxu0 0
  %1490 = vmatpush1.bf16.msra.mxu0 0
  %1491 = vmatprep.subr.bf16.mxu0 0
  %1492 = vmatpush1.bf16.msra.mxu0 0
  %1493 = vmatprep.subr.bf16.mxu0 0
  %1494 = vmatpush1.bf16.msra.mxu0 0
  %1495 = vmatprep.subr.bf16.mxu0 0
  %1496 = vmatpush1.bf16.msra.mxu0 0
  %1497 = vmatprep.subr.bf16.mxu0 0
  %1498 = vmatpush1.bf16.msra.mxu0 0
  %1499 = vmatprep.subr.bf16.mxu0 0
  %1500 = vmatpush1.bf16.msra.mxu0 0
  %1501 = vmatprep.subr.bf16.mxu0 0
  %1502 = vmatpush1.bf16.msra.mxu0 0
  %1503 = vmatprep.subr.bf16.mxu0 0
  %1504 = vmatpush1.bf16.msra.mxu0 0
  %1505 = vmatprep.subr.bf16.mxu0 0
  %1506 = vmatpush1.bf16.msra.mxu0 0
  %1507 = vmatprep.subr.bf16.mxu0 0
  %1508 = vmatpush1.bf16.msra.mxu0 0
  %1509 = vmatprep.subr.bf16.mxu0 0
  %1510 = vmatpush1.bf16.msra.mxu0 0
  %1511 = vmatprep.subr.bf16.mxu0 0
  %1512 = vmatpush1.bf16.msra.mxu0 0
  %1513 = vmatprep.subr.bf16.mxu0 0
  %1514 = vmatpush1.bf16.msra.mxu0 0
  %1515 = vmatprep.mubr.bf16.mxu0 0
  %1516 = vmatmul.mubr.bf16.gmra.mrb[0].mxu0 %v1481
  %v1517 = vpop.f32.mrb[0].mxu0
  %v1518 = vadd.f32 %v1478, %v1517
  %v1519 = vpop.f32.mrb[0].mxu0
  %v1520 = vadd.f32 %v1478, %v1519
  %v1521 = vpop.f32.mrb[0].mxu0
  %v1522 = vpop.f32.mrb[0].mxu0
  %1523 = vdwg.mxu0
  %1524 = vmatprep.subr.bf16.mxu0 %v1466
  %1525 = vmatpush1.bf16.msra.mxu0 %v1465
  %1526 = vmatprep.subr.bf16.mxu0 %v1471
  %1527 = vmatpush1.bf16.msra.mxu0 %v1470
  %1528 = vmatprep.subr.bf16.mxu0 0
  %1529 = vmatpush1.bf16.msra.mxu0 0
  %1530 = vmatprep.subr.bf16.mxu0 0
  %1531 = vmatpush1.bf16.msra.mxu0 0
  %1532 = vmatprep.subr.bf16.mxu0 0
  %1533 = vmatpush1.bf16.msra.mxu0 0
  %1534 = vmatprep.subr.bf16.mxu0 0
  %1535 = vmatpush1.bf16.msra.mxu0 0
  %1536 = vmatprep.subr.bf16.mxu0 0
  %1537 = vmatpush1.bf16.msra.mxu0 0
  %1538 = vmatprep.subr.bf16.mxu0 0
  %1539 = vmatpush1.bf16.msra.mxu0 0
  %1540 = vmatprep.subr.bf16.mxu0 0
  %1541 = vmatpush1.bf16.msra.mxu0 0
  %1542 = vmatprep.subr.bf16.mxu0 0
  %1543 = vmatpush1.bf16.msra.mxu0 0
  %1544 = vmatprep.subr.bf16.mxu0 0
  %1545 = vmatpush1.bf16.msra.mxu0 0
  %1546 = vmatprep.subr.bf16.mxu0 0
  %1547 = vmatpush1.bf16.msra.mxu0 0
  %1548 = vmatprep.subr.bf16.mxu0 0
  %1549 = vmatpush1.bf16.msra.mxu0 0
  %1550 = vmatprep.subr.bf16.mxu0 0
  %1551 = vmatpush1.bf16.msra.mxu0 0
  %1552 = vmatprep.subr.bf16.mxu0 0
  %1553 = vmatpush1.bf16.msra.mxu0 0
  %1554 = vmatprep.subr.bf16.mxu0 0
  %1555 = vmatpush1.bf16.msra.mxu0 0
  %1556 = vmatprep.mubr.bf16.mxu0 0
  %1557 = vmatmul.mubr.bf16.gmra.mrb[0].mxu0 %v1481
  %v1558 = vpop.f32.mrb[0].mxu0
  %v1559 = vadd.f32 %v1478, %v1558
  %v1560 = vpop.f32.mrb[0].mxu0
  %v1561 = vadd.f32 %v1478, %v1560
  %v1562 = vpop.f32.mrb[0].mxu0
  %v1563 = vpop.f32.mrb[0].mxu0
  %1564 = vdwg.mxu0
  %1565 = vmatprep.subr.bf16.mxu0 0
  %1566 = vmatpush1.bf16.msra.mxu0 %v1467
  %1567 = vmatprep.subr.bf16.mxu0 0
  %1568 = vmatpush1.bf16.msra.mxu0 %v1472
  %1569 = vmatprep.subr.bf16.mxu0 0
  %1570 = vmatpush1.bf16.msra.mxu0 0
  %1571 = vmatprep.subr.bf16.mxu0 0
  %1572 = vmatpush1.bf16.msra.mxu0 0
  %1573 = vmatprep.subr.bf16.mxu0 0
  %1574 = vmatpush1.bf16.msra.mxu0 0
  %1575 = vmatprep.subr.bf16.mxu0 0
  %1576 = vmatpush1.bf16.msra.mxu0 0
  %1577 = vmatprep.subr.bf16.mxu0 0
  %1578 = vmatpush1.bf16.msra.mxu0 0
  %1579 = vmatprep.subr.bf16.mxu0 0
  %1580 = vmatpush1.bf16.msra.mxu0 0
  %1581 = vmatprep.subr.bf16.mxu0 0
  %1582 = vmatpush1.bf16.msra.mxu0 0
  %1583 = vmatprep.subr.bf16.mxu0 0
  %1584 = vmatpush1.bf16.msra.mxu0 0
  %1585 = vmatprep.subr.bf16.mxu0 0
  %1586 = vmatpush1.bf16.msra.mxu0 0
  %1587 = vmatprep.subr.bf16.mxu0 0
  %1588 = vmatpush1.bf16.msra.mxu0 0
  %1589 = vmatprep.subr.bf16.mxu0 0
  %1590 = vmatpush1.bf16.msra.mxu0 0
  %1591 = vmatprep.subr.bf16.mxu0 0
  %1592 = vmatpush1.bf16.msra.mxu0 0
  %1593 = vmatprep.subr.bf16.mxu0 0
  %1594 = vmatpush1.bf16.msra.mxu0 0
  %1595 = vmatprep.subr.bf16.mxu0 0
  %1596 = vmatpush1.bf16.msra.mxu0 0
  %1597 = vmatprep.mubr.bf16.mxu0 0
  %1598 = vmatmul.mubr.bf16.gmra.mrb[0].mxu0 %v1481
  %v1599 = vpop.f32.mrb[0].mxu0
  %v1600 = vadd.f32 %v1478, %v1599
  %v1601 = vpop.f32.mrb[0].mxu0
  %v1602 = vpop.f32.mrb[0].mxu0
  %v1603 = vpop.f32.mrb[0].mxu0
  %1604 = vdwg.mxu0
  %v1610 = vcombine.low %v1518, %v1520
  %v1611 = vcombine.low %v1559, %v1561
  %v1613 = vunpack.c.l.s4 1966171168
  %v1614 = vunpack.c.0.s8 %v1613
  %v1615 = vlaneseq
  %v1616 = vshrl.u32 %v1615, 7
  %v1617 = vsub.s32 %v1614, %v1616
  %v1618 = vrot.slane %v1610, %v1617
  %v1620 = vunpack.c.l.s4 1966171168
  %v1621 = vunpack.c.0.s8 %v1620
  %v1622 = vlaneseq
  %v1623 = vshrl.u32 %v1622, 7
  %v1624 = vsub.s32 %v1621, %v1623
  %v1625 = vrot.slane %v1611, %v1624
  %v1627 = vunpack.c.l.s4 1966171168
  %v1628 = vunpack.c.0.s8 %v1627
  %v1629 = vlaneseq
  %v1630 = vshrl.u32 %v1629, 7
  %v1631 = vsub.s32 %v1628, %v1630
  %v1632 = vrot.slane %v1600, %v1631
  %v1633 = vcombine.low %v1618, %v1625
  %v1635 = vunpack.c.l.s4 1966171168
  %v1636 = vunpack.c.0.s8 %v1635
  %v1637 = vlaneseq
  %v1638 = vshrl.u32 %v1637, 7
  %v1639 = vsub.s32 %v1636, %v1638
  %v1640 = vrot.slane %v1633, %v1639
  %v1642 = vunpack.c.l.s4 1966171168
  %v1643 = vunpack.c.0.s8 %v1642
  %v1644 = vlaneseq
  %v1645 = vshrl.u32 %v1644, 7
  %v1646 = vsub.s32 %v1643, %v1645
  %v1647 = vrot.slane %v1632, %v1646
  %v1648 = vcombine.low %v1640, %v1647
  %v1650 = vlaneseq
  %vm1651 = vcmp.ge.s32.totalorder %v1650, 0
  %vm1652 = vcmp.lt.s32.totalorder %v1650, 640
  %vm1653 = vmand %vm1651, %vm1652
  %1654 = vst.msk [vmem:[%s6] sm:$0x1f] %vm1653, %v1648
  // Predicated region
  $region26: #{floodnet_forward.1} parent=0 // pred_check
    _
  $region27: #{floodnet_forward.1} parent=0 // pred_check_branch
    %1656 = sbr.rel (0) target = $region29
  $region28: #{floodnet_forward.1} parent=0 // pred_region
    _
  $region29: #{floodnet_forward.1} parent=0 // pred_fallthru
    _
  // Predicated region
  $region30: #{floodnet_forward.1} parent=0 // pred_check
    _
  $region31: #{floodnet_forward.1} parent=0 // pred_check_branch
    %1658 = sbr.rel (0) target = $region33
  $region32: #{floodnet_forward.1} parent=0 // pred_region
    _
  $region33: #{floodnet_forward.1} parent=0 // pred_fallthru
    _

</llo_original>
